<compile_context>
chip_gen: v6e
topology: v6e:2x2x1
jax: 0.10.0
libtpu: 0.0.40
codegen_flags: <defaults>
</compile_context>

<pallas_src>
import functools
import math

import jax
import jax.numpy as jnp
from jax import lax
from jax.experimental import pallas as pl
from jax.experimental.pallas import tpu as pltpu


def _proj_kernel(x_ref, wq_ref, wlat_ref, wqk_ref, latent_ref, qabs_ref, *, num_heads):
    """Projection + MLA weight absorption for one (batch, seq-tile) block.

    x_ref      : (1, ts, D)     compute dtype
    wq_ref     : (D, D)         W_q^T pre-scaled by 1/sqrt(d_model)
    wlat_ref   : (D, L)         fused (W_k^T + W_v^T) @ W_down_kv^T
    wqk_ref    : (H, Dh, L)     per-head W_up_k rows (absorbed-key weight)
    latent_ref : (1, ts, L)     output, x.dtype
    qabs_ref   : (1, H, ts, L)  output, compute dtype
    """
    x = x_ref[0]                                         # (ts, D)
    cdt = x.dtype
    d_model = x.shape[1]
    dh = d_model // num_heads

    latent = jnp.dot(x, wlat_ref[...], preferred_element_type=jnp.float32)   # (ts, L)
    latent_ref[0] = latent.astype(latent_ref.dtype)
    # TODO(synk): optional `memory` blending ((latent_kv + memory) / 2) not implemented
    # (memory=None path only).

    # TODO(synk): for very large d_model, panel-tile W_q over output columns
    # (extra grid axis) instead of holding the full (D, D) weight in VMEM.
    q = jnp.dot(x, wq_ref[...], preferred_element_type=jnp.float32).astype(cdt)  # (ts, D)
    for h in range(num_heads):
        qh = q[:, h * dh:(h + 1) * dh]                   # (ts, Dh)
        q_abs = jnp.dot(qh, wqk_ref[h], preferred_element_type=jnp.float32)  # (ts, L)
        qabs_ref[0, h] = q_abs.astype(cdt)               # full trailing-dims store


def _attn_kernel(qabs_ref, latent_ref, w_ov_ref, out_ref, *, num_heads):
    """Absorbed-latent attention for one (batch, query-tile) block.

    qabs_ref   : (1, H, tq, L)  compute dtype
    latent_ref : (1, S, L)      x.dtype (serves as both K and V in latent space)
    w_ov_ref   : (H, L, D)      fused W_up_v^T @ W_o^T per head
    out_ref    : (1, tq, D)
    """
    cdt = qabs_ref.dtype
    latent = latent_ref[0].astype(cdt)                   # (S, L)
    tq = qabs_ref.shape[2]
    d_model = w_ov_ref.shape[2]

    # TODO(synk): for S too large for VMEM, add a KV grid axis with flash-style
    # online softmax; here the full latent (S, L) stays resident per batch element.
    out_acc = jnp.zeros((tq, d_model), jnp.float32)
    for h in range(num_heads):
        q_abs = qabs_ref[0, h]                           # (tq, L), already compute dtype
        s = lax.dot_general(q_abs, latent, (((1,), (1,)), ((), ())),
                            preferred_element_type=jnp.float32)              # (tq, S)
        # Softmax: exp in the compute dtype (bf16 doubles EUP throughput on
        # v6e/v7x; identity when compute dtype is f32), f32 row-sum accumulation.
        p = jnp.exp((s - jnp.max(s, axis=-1, keepdims=True)).astype(cdt))
        denom = jnp.sum(p.astype(jnp.float32), axis=-1, keepdims=True)
        a = p * pl.reciprocal(denom, approx=True).astype(cdt)                # (tq, S)
        ctx = jnp.dot(a, latent, preferred_element_type=jnp.float32)         # (tq, L)
        out_acc = out_acc + jnp.dot(ctx.astype(cdt), w_ov_ref[h],
                                    preferred_element_type=jnp.float32)      # (tq, D)
    out_ref[0] = out_acc.astype(out_ref.dtype)


def _pick_tile(s):
    """Largest tile from a preferred list that divides S (else the full extent)."""
    for t in (256, 128, 64, 32, 16, 8):
        if s % t == 0:
            return t
    return s  # full extent (always legal w.r.t. the (8, 128) block constraint)


def mhla_forward(x, params, num_heads, compute_dtype=None):
    """MHLA forward. x: (B, S, D); params: PyTorch-layout weights (out_feat, in_feat).

    Returns (output, latent_kv) like the PyTorch module (memory=None path).
    compute_dtype is the MXU/EUP dtype (e.g. jnp.bfloat16 on v6e/v7x; keep float32
    on v5e).  Accumulation and outputs stay in float32 / x.dtype.
    """
    B, S, D = x.shape
    H = num_heads
    assert D % H == 0, "d_model must be divisible by num_heads"
    dh = D // H
    L = params["W_down_kv"].shape[0]
    if compute_dtype is None:
        compute_dtype = x.dtype
    cdt = jnp.dtype(compute_dtype)
    scale = 1.0 / math.sqrt(D)   # PyTorch scales by sqrt(d_model), not head_dim

    # ---- weight prep (plain JAX glue, f32 then cast) -------------------------
    wq_t = (params["W_q"].T * scale).astype(cdt)                          # (D, D)
    w_latent_t = ((params["W_k"].T + params["W_v"].T)
                  @ params["W_down_kv"].T).astype(cdt)                    # (D, L)
    wqk = params["W_up_k"].reshape(H, dh, L).astype(cdt)                  # (H, Dh, L)
    wupv_t = params["W_up_v"].T                                           # (L, D)
    wo_t = params["W_o"].T                                                # (D, D)
    w_ov = jnp.stack(
        [wupv_t[:, h * dh:(h + 1) * dh] @ wo_t[h * dh:(h + 1) * dh, :]
         for h in range(H)], axis=0).astype(cdt)                          # (H, L, D)

    xc = x.astype(cdt)

    tq = _pick_tile(S)
    nq = S // tq
    csz = cdt.itemsize
    xsz = jnp.dtype(x.dtype).itemsize

    # ---- VMEM budgets: derive from block bytes, cap inside v7x's 64 MiB/TC ---
    def vmem_limit(block_bytes):
        est = 2 * block_bytes + (8 << 20)          # double buffers + headroom
        return int(min(max(est, 16 << 20), 48 << 20))

    proj_bytes = (tq * D * csz + tq * L * xsz + H * tq * L * csz
                  + (D * D + 2 * D * L) * csz)
    attn_bytes = (H * tq * L * csz + S * L * xsz + H * L * D * csz
                  + tq * D * xsz + tq * S * 4)

    def run(single_buffer_weights):
        def wspec(shape):
            kwargs = {}
            if single_buffer_weights:
                # Grid-invariant weights: one VMEM buffer is enough (halves residency).
                kwargs["pipeline_mode"] = pl.Buffered(1)
            return pl.BlockSpec(shape, lambda b, t: (0,) * len(shape), **kwargs)

        latent, q_abs = pl.pallas_call(
            functools.partial(_proj_kernel, num_heads=H),
            out_shape=(
                jax.ShapeDtypeStruct((B, S, L), x.dtype),
                jax.ShapeDtypeStruct((B, H, S, L), cdt),
            ),
            grid=(B, nq),
            in_specs=[
                pl.BlockSpec((1, tq, D), lambda b, t: (b, t, 0)),
                wspec((D, D)),
                wspec((D, L)),
                wspec((H, dh, L)),
            ],
            out_specs=(
                pl.BlockSpec((1, tq, L), lambda b, t: (b, t, 0)),
                pl.BlockSpec((1, H, tq, L), lambda b, t: (b, 0, t, 0)),
            ),
            compiler_params=pltpu.CompilerParams(
                dimension_semantics=("parallel", "parallel"),
                vmem_limit_bytes=vmem_limit(proj_bytes),
            ),
        )(xc, wq_t, w_latent_t, wqk)

        out = pl.pallas_call(
            functools.partial(_attn_kernel, num_heads=H),
            out_shape=jax.ShapeDtypeStruct((B, S, D), x.dtype),
            grid=(B, nq),
            in_specs=[
                pl.BlockSpec((1, H, tq, L), lambda b, t: (b, 0, t, 0)),
                pl.BlockSpec((1, S, L), lambda b, t: (b, 0, 0)),   # constant over t: fetched once per b
                wspec((H, L, D)),
            ],
            out_specs=pl.BlockSpec((1, tq, D), lambda b, t: (b, t, 0)),
            compiler_params=pltpu.CompilerParams(
                dimension_semantics=("parallel", "parallel"),
                vmem_limit_bytes=vmem_limit(attn_bytes),
            ),
        )(q_abs, latent, w_ov)
        return out, latent

    try:
        return run(single_buffer_weights=True)
    except Exception:
        # TODO(synk): pl.Buffered(1) rejected by this jax/Mosaic version; fall back
        # to the default double-buffered weight pipeline.
        return run(single_buffer_weights=False)


def mhla_reference(x, params, num_heads):
    """Pure-JAX reference mirroring the PyTorch forward exactly (f32)."""
    B, S, D = x.shape
    q = x @ params["W_q"].T
    k = x @ params["W_k"].T
    v = x @ params["W_v"].T
    latent = (k + v) @ params["W_down_kv"].T
    k_rec = latent @ params["W_up_k"].T
    v_rec = latent @ params["W_up_v"].T
    Dh = D // num_heads
    qh = q.reshape(B, S, num_heads, Dh).transpose(0, 2, 1, 3)
    kh = k_rec.reshape(B, S, num_heads, Dh).transpose(0, 2, 1, 3)
    vh = v_rec.reshape(B, S, num_heads, Dh).transpose(0, 2, 1, 3)
    s = jnp.einsum("bhqd,bhkd->bhqk", qh, kh) / math.sqrt(D)
    a = jax.nn.softmax(s, axis=-1)
    o = jnp.einsum("bhqk,bhkd->bhqd", a, vh)
    o = o.transpose(0, 2, 1, 3).reshape(B, S, D)
    return o @ params["W_o"].T, latent


if __name__ == "__main__":
    # Small but tiling-exercising shapes: S=24 -> tq=8, 3 query tiles per batch.
    B, S, D, H, L = 2, 24, 32, 4, 16

    key = jax.random.PRNGKey(0)
    keys = jax.random.split(key, 8)
    x = jax.random.normal(keys[0], (B, S, D), dtype=jnp.float32)
    params = {
        "W_q": jax.random.normal(keys[1], (D, D), dtype=jnp.float32) * 0.1,
        "W_k": jax.random.normal(keys[2], (D, D), dtype=jnp.float32) * 0.1,
        "W_v": jax.random.normal(keys[3], (D, D), dtype=jnp.float32) * 0.1,
        "W_o": jax.random.normal(keys[4], (D, D), dtype=jnp.float32) * 0.1,
        "W_down_kv": jax.random.normal(keys[5], (L, D), dtype=jnp.float32) * 0.1,
        "W_up_k": jax.random.normal(keys[6], (D, L), dtype=jnp.float32) * 0.1,
        "W_up_v": jax.random.normal(keys[7], (D, L), dtype=jnp.float32) * 0.1,
    }

    ref_out, ref_latent = mhla_reference(x, params, H)

    # f32 compute path (tight check; approx reciprocal + weight fusion -> small slack).
    out, latent = mhla_forward(x, params, H)
    out = jax.block_until_ready(out)
    latent = jax.block_until_ready(latent)
    assert jnp.allclose(out, ref_out, atol=5e-3, rtol=5e-3), "f32 output mismatch"
    assert jnp.allclose(latent, ref_latent, atol=1e-3, rtol=1e-3), "f32 latent mismatch"

    # bf16 MXU path (f32 accumulation, f32 outputs) -- looser tolerance.
    out_bf, latent_bf = mhla_forward(x, params, H, compute_dtype=jnp.bfloat16)
    out_bf = jax.block_until_ready(out_bf)
    latent_bf = jax.block_until_ready(latent_bf)
    assert jnp.allclose(out_bf, ref_out, atol=5e-2, rtol=5e-2), "bf16 output mismatch"
    assert jnp.allclose(latent_bf, ref_latent, atol=5e-2, rtol=5e-2), "bf16 latent mismatch"

    print("KERNEL_OK")
</pallas_src>

<mosaic_0001>
module attributes {stable_mosaic.version = 11 : i64} {
  func.func @_proj_kernel(%arg0: i32, %arg1: i32, %arg2: memref<1x8x32xf32, #tpu.memory_space<vmem>>, %arg3: memref<32x32xf32, #tpu.memory_space<vmem>>, %arg4: memref<32x16xf32, #tpu.memory_space<vmem>>, %arg5: memref<4x8x16xf32, #tpu.memory_space<vmem>>, %arg6: memref<1x8x16xf32, #tpu.memory_space<vmem>>, %arg7: memref<1x4x8x16xf32, #tpu.memory_space<vmem>>) attributes {dimension_semantics = [#tpu.dimension_semantics<parallel>, #tpu.dimension_semantics<parallel>], iteration_bounds = array<i64: 2, 3>, scalar_prefetch = 0 : i64, scratch_operands = 0 : i64, tpu.core_type = #tpu.core_type<tc>, window_params = [{transform_indices = @transform_0, window_bounds = array<i64: 1, 8, 32>}, {pipeline_mode = #tpu.pipeline_mode<synchronous>, transform_indices = @transform_1, window_bounds = array<i64: 32, 32>}, {pipeline_mode = #tpu.pipeline_mode<synchronous>, transform_indices = @transform_2, window_bounds = array<i64: 32, 16>}, {pipeline_mode = #tpu.pipeline_mode<synchronous>, transform_indices = @transform_3, window_bounds = array<i64: 4, 8, 16>}, {transform_indices = @transform_4, window_bounds = array<i64: 1, 8, 16>}, {transform_indices = @transform_5, window_bounds = array<i64: 1, 4, 8, 16>}]} {
    %c0 = arith.constant 0 : index
    %c0_0 = arith.constant 0 : index
    %c0_1 = arith.constant 0 : index
    %0 = vector.load %arg2[%c0, %c0_0, %c0_1] : memref<1x8x32xf32, #tpu.memory_space<vmem>>, vector<1x8x32xf32>
    %1 = vector.shape_cast %0 : vector<1x8x32xf32> to vector<8x32xf32>
    %c0_2 = arith.constant 0 : index
    %c0_3 = arith.constant 0 : index
    %2 = vector.load %arg4[%c0_2, %c0_3] : memref<32x16xf32, #tpu.memory_space<vmem>>, vector<32x16xf32>
    %cst = arith.constant dense<0.000000e+00> : vector<8x16xf32>
    %3 = tpu.matmul %1, %2, %cst {dimension_numbers = #tpu.dot_dimension_numbers<[1], [0], [0], [1], [0, 0, 1, 1], [], []>} : vector<8x32xf32>, vector<32x16xf32>, vector<8x16xf32> -> vector<8x16xf32>
    %c0_4 = arith.constant 0 : index
    %c0_5 = arith.constant 0 : index
    %c0_6 = arith.constant 0 : index
    %4 = vector.load %arg6[%c0_4, %c0_5, %c0_6] : memref<1x8x16xf32, #tpu.memory_space<vmem>>, vector<1x8x16xf32>
    %5 = vector.shape_cast %4 : vector<1x8x16xf32> to vector<8x16xf32>
    %6 = vector.shape_cast %3 : vector<8x16xf32> to vector<1x8x16xf32>
    tpu.vector_store %arg6[%c0_4, %c0_5, %c0_6], %6 {strides = array<i32>} : memref<1x8x16xf32, #tpu.memory_space<vmem>>, vector<1x8x16xf32>,
    %c0_7 = arith.constant 0 : index
    %c0_8 = arith.constant 0 : index
    %7 = vector.load %arg3[%c0_7, %c0_8] : memref<32x32xf32, #tpu.memory_space<vmem>>, vector<32x32xf32>
    %cst_9 = arith.constant dense<0.000000e+00> : vector<8x32xf32>
    %8 = tpu.matmul %1, %7, %cst_9 {dimension_numbers = #tpu.dot_dimension_numbers<[1], [0], [0], [1], [0, 0, 1, 1], [], []>} : vector<8x32xf32>, vector<32x32xf32>, vector<8x32xf32> -> vector<8x32xf32>
    %9 = vector.extract_strided_slice %8 {offsets = [0, 0], sizes = [8, 8], strides = [1, 1]} : vector<8x32xf32> to vector<8x8xf32>
    %c0_10 = arith.constant 0 : index
    %c0_11 = arith.constant 0 : index
    %c0_12 = arith.constant 0 : index
    %10 = vector.load %arg5[%c0_10, %c0_11, %c0_12] : memref<4x8x16xf32, #tpu.memory_space<vmem>>, vector<1x8x16xf32>
    %11 = vector.shape_cast %10 : vector<1x8x16xf32> to vector<8x16xf32>
    %cst_13 = arith.constant dense<0.000000e+00> : vector<8x16xf32>
    %12 = tpu.matmul %9, %11, %cst_13 {dimension_numbers = #tpu.dot_dimension_numbers<[1], [0], [0], [1], [0, 0, 1, 1], [], []>} : vector<8x8xf32>, vector<8x16xf32>, vector<8x16xf32> -> vector<8x16xf32>
    %c0_14 = arith.constant 0 : index
    %c0_15 = arith.constant 0 : index
    %c0_16 = arith.constant 0 : index
    %c0_17 = arith.constant 0 : index
    %13 = vector.load %arg7[%c0_14, %c0_15, %c0_16, %c0_17] : memref<1x4x8x16xf32, #tpu.memory_space<vmem>>, vector<1x1x8x16xf32>
    %14 = vector.shape_cast %13 : vector<1x1x8x16xf32> to vector<8x16xf32>
    %15 = vector.shape_cast %12 : vector<8x16xf32> to vector<1x1x8x16xf32>
    tpu.vector_store %arg7[%c0_14, %c0_15, %c0_16, %c0_17], %15 {strides = array<i32>} : memref<1x4x8x16xf32, #tpu.memory_space<vmem>>, vector<1x1x8x16xf32>,
    %16 = vector.extract_strided_slice %8 {offsets = [0, 8], sizes = [8, 8], strides = [1, 1]} : vector<8x32xf32> to vector<8x8xf32>
    %c1 = arith.constant 1 : index
    %c0_18 = arith.constant 0 : index
    %c0_19 = arith.constant 0 : index
    %17 = vector.load %arg5[%c1, %c0_18, %c0_19] : memref<4x8x16xf32, #tpu.memory_space<vmem>>, vector<1x8x16xf32>
    %18 = vector.shape_cast %17 : vector<1x8x16xf32> to vector<8x16xf32>
    %cst_20 = arith.constant dense<0.000000e+00> : vector<8x16xf32>
    %19 = tpu.matmul %16, %18, %cst_20 {dimension_numbers = #tpu.dot_dimension_numbers<[1], [0], [0], [1], [0, 0, 1, 1], [], []>} : vector<8x8xf32>, vector<8x16xf32>, vector<8x16xf32> -> vector<8x16xf32>
    %c0_21 = arith.constant 0 : index
    %c1_22 = arith.constant 1 : index
    %c0_23 = arith.constant 0 : index
    %c0_24 = arith.constant 0 : index
    %20 = vector.load %arg7[%c0_21, %c1_22, %c0_23, %c0_24] : memref<1x4x8x16xf32, #tpu.memory_space<vmem>>, vector<1x1x8x16xf32>
    %21 = vector.shape_cast %20 : vector<1x1x8x16xf32> to vector<8x16xf32>
    %22 = vector.shape_cast %19 : vector<8x16xf32> to vector<1x1x8x16xf32>
    tpu.vector_store %arg7[%c0_21, %c1_22, %c0_23, %c0_24], %22 {strides = array<i32>} : memref<1x4x8x16xf32, #tpu.memory_space<vmem>>, vector<1x1x8x16xf32>,
    %23 = vector.extract_strided_slice %8 {offsets = [0, 16], sizes = [8, 8], strides = [1, 1]} : vector<8x32xf32> to vector<8x8xf32>
    %c2 = arith.constant 2 : index
    %c0_25 = arith.constant 0 : index
    %c0_26 = arith.constant 0 : index
    %24 = vector.load %arg5[%c2, %c0_25, %c0_26] : memref<4x8x16xf32, #tpu.memory_space<vmem>>, vector<1x8x16xf32>
    %25 = vector.shape_cast %24 : vector<1x8x16xf32> to vector<8x16xf32>
    %cst_27 = arith.constant dense<0.000000e+00> : vector<8x16xf32>
    %26 = tpu.matmul %23, %25, %cst_27 {dimension_numbers = #tpu.dot_dimension_numbers<[1], [0], [0], [1], [0, 0, 1, 1], [], []>} : vector<8x8xf32>, vector<8x16xf32>, vector<8x16xf32> -> vector<8x16xf32>
    %c0_28 = arith.constant 0 : index
    %c2_29 = arith.constant 2 : index
    %c0_30 = arith.constant 0 : index
    %c0_31 = arith.constant 0 : index
    %27 = vector.load %arg7[%c0_28, %c2_29, %c0_30, %c0_31] : memref<1x4x8x16xf32, #tpu.memory_space<vmem>>, vector<1x1x8x16xf32>
    %28 = vector.shape_cast %27 : vector<1x1x8x16xf32> to vector<8x16xf32>
    %29 = vector.shape_cast %26 : vector<8x16xf32> to vector<1x1x8x16xf32>
    tpu.vector_store %arg7[%c0_28, %c2_29, %c0_30, %c0_31], %29 {strides = array<i32>} : memref<1x4x8x16xf32, #tpu.memory_space<vmem>>, vector<1x1x8x16xf32>,
    %30 = vector.extract_strided_slice %8 {offsets = [0, 24], sizes = [8, 8], strides = [1, 1]} : vector<8x32xf32> to vector<8x8xf32>
    %c3 = arith.constant 3 : index
    %c0_32 = arith.constant 0 : index
    %c0_33 = arith.constant 0 : index
    %31 = vector.load %arg5[%c3, %c0_32, %c0_33] : memref<4x8x16xf32, #tpu.memory_space<vmem>>, vector<1x8x16xf32>
    %32 = vector.shape_cast %31 : vector<1x8x16xf32> to vector<8x16xf32>
    %cst_34 = arith.constant dense<0.000000e+00> : vector<8x16xf32>
    %33 = tpu.matmul %30, %32, %cst_34 {dimension_numbers = #tpu.dot_dimension_numbers<[1], [0], [0], [1], [0, 0, 1, 1], [], []>} : vector<8x8xf32>, vector<8x16xf32>, vector<8x16xf32> -> vector<8x16xf32>
    %c0_35 = arith.constant 0 : index
    %c3_36 = arith.constant 3 : index
    %c0_37 = arith.constant 0 : index
    %c0_38 = arith.constant 0 : index
    %34 = vector.load %arg7[%c0_35, %c3_36, %c0_37, %c0_38] : memref<1x4x8x16xf32, #tpu.memory_space<vmem>>, vector<1x1x8x16xf32>
    %35 = vector.shape_cast %34 : vector<1x1x8x16xf32> to vector<8x16xf32>
    %36 = vector.shape_cast %33 : vector<8x16xf32> to vector<1x1x8x16xf32>
    tpu.vector_store %arg7[%c0_35, %c3_36, %c0_37, %c0_38], %36 {strides = array<i32>} : memref<1x4x8x16xf32, #tpu.memory_space<vmem>>, vector<1x1x8x16xf32>,
    return
  }
  func.func @transform_0(%arg0: i32, %arg1: i32) -> (i32, i32, i32) {
    %c0_i32 = arith.constant 0 : i32
    %c0_i32_0 = arith.constant 0 : i32
    return %arg0, %arg1, %c0_i32 : i32, i32, i32
  }
  func.func @transform_1(%arg0: i32, %arg1: i32) -> (i32, i32) {
    %c0_i32 = arith.constant 0 : i32
    %c0_i32_0 = arith.constant 0 : i32
    %c0_i32_1 = arith.constant 0 : i32
    return %c0_i32, %c0_i32_0 : i32, i32
  }
  func.func @transform_2(%arg0: i32, %arg1: i32) -> (i32, i32) {
    %c0_i32 = arith.constant 0 : i32
    %c0_i32_0 = arith.constant 0 : i32
    %c0_i32_1 = arith.constant 0 : i32
    return %c0_i32, %c0_i32_0 : i32, i32
  }
  func.func @transform_3(%arg0: i32, %arg1: i32) -> (i32, i32, i32) {
    %c0_i32 = arith.constant 0 : i32
    %c0_i32_0 = arith.constant 0 : i32
    %c0_i32_1 = arith.constant 0 : i32
    %c0_i32_2 = arith.constant 0 : i32
    return %c0_i32, %c0_i32_0, %c0_i32_1 : i32, i32, i32
  }
  func.func @transform_4(%arg0: i32, %arg1: i32) -> (i32, i32, i32) {
    %c0_i32 = arith.constant 0 : i32
    %c0_i32_0 = arith.constant 0 : i32
    return %arg0, %arg1, %c0_i32 : i32, i32, i32
  }
  func.func @transform_5(%arg0: i32, %arg1: i32) -> (i32, i32, i32, i32) {
    %c0_i32 = arith.constant 0 : i32
    %c0_i32_0 = arith.constant 0 : i32
    %c0_i32_1 = arith.constant 0 : i32
    return %arg0, %c0_i32, %arg1, %c0_i32_0 : i32, i32, i32, i32
  }
}

module attributes {stable_mosaic.version = 11 : i64} {
  func.func @_proj_kernel(%arg0: i32, %arg1: i32, %arg2: memref<1x8x32xf32, #tpu.memory_space<vmem>>, %arg3: memref<32x32xf32, #tpu.memory_space<vmem>>, %arg4: memref<32x16xf32, #tpu.memory_space<vmem>>, %arg5: memref<4x8x16xf32, #tpu.memory_space<vmem>>, %arg6: memref<1x8x16xf32, #tpu.memory_space<vmem>>, %arg7: memref<1x4x8x16xf32, #tpu.memory_space<vmem>>) attributes {dimension_semantics = [#tpu.dimension_semantics<parallel>, #tpu.dimension_semantics<parallel>], iteration_bounds = array<i64: 2, 3>, scalar_prefetch = 0 : i64, scratch_operands = 0 : i64, tpu.core_type = #tpu.core_type<tc>, window_params = [{transform_indices = @transform_0, window_bounds = array<i64: 1, 8, 32>}, {pipeline_mode = #tpu.pipeline_mode<synchronous>, transform_indices = @transform_1, window_bounds = array<i64: 32, 32>}, {pipeline_mode = #tpu.pipeline_mode<synchronous>, transform_indices = @transform_2, window_bounds = array<i64: 32, 16>}, {pipeline_mode = #tpu.pipeline_mode<synchronous>, transform_indices = @transform_3, window_bounds = array<i64: 4, 8, 16>}, {transform_indices = @transform_4, window_bounds = array<i64: 1, 8, 16>}, {transform_indices = @transform_5, window_bounds = array<i64: 1, 4, 8, 16>}]} {
    %c0 = arith.constant 0 : index
    %c0_0 = arith.constant 0 : index
    %c0_1 = arith.constant 0 : index
    %0 = vector.load %arg2[%c0, %c0_0, %c0_1] : memref<1x8x32xf32, #tpu.memory_space<vmem>>, vector<1x8x32xf32>
    %1 = vector.shape_cast %0 : vector<1x8x32xf32> to vector<8x32xf32>
    %c0_2 = arith.constant 0 : index
    %c0_3 = arith.constant 0 : index
    %2 = vector.load %arg4[%c0_2, %c0_3] : memref<32x16xf32, #tpu.memory_space<vmem>>, vector<32x16xf32>
    %cst = arith.constant dense<0.000000e+00> : vector<8x16xf32>
    %3 = tpu.matmul %1, %2, %cst {dimension_numbers = #tpu.dot_dimension_numbers<[1], [0], [0], [1], [0, 0, 1, 1], [], []>} : vector<8x32xf32>, vector<32x16xf32>, vector<8x16xf32> -> vector<8x16xf32>
    %c0_4 = arith.constant 0 : index
    %c0_5 = arith.constant 0 : index
    %c0_6 = arith.constant 0 : index
    %4 = vector.load %arg6[%c0_4, %c0_5, %c0_6] : memref<1x8x16xf32, #tpu.memory_space<vmem>>, vector<1x8x16xf32>
    %5 = vector.shape_cast %4 : vector<1x8x16xf32> to vector<8x16xf32>
    %6 = vector.shape_cast %3 : vector<8x16xf32> to vector<1x8x16xf32>
    tpu.vector_store %arg6[%c0_4, %c0_5, %c0_6], %6 {strides = array<i32>} : memref<1x8x16xf32, #tpu.memory_space<vmem>>, vector<1x8x16xf32>,
    %c0_7 = arith.constant 0 : index
    %c0_8 = arith.constant 0 : index
    %7 = vector.load %arg3[%c0_7, %c0_8] : memref<32x32xf32, #tpu.memory_space<vmem>>, vector<32x32xf32>
    %cst_9 = arith.constant dense<0.000000e+00> : vector<8x32xf32>
    %8 = tpu.matmul %1, %7, %cst_9 {dimension_numbers = #tpu.dot_dimension_numbers<[1], [0], [0], [1], [0, 0, 1, 1], [], []>} : vector<8x32xf32>, vector<32x32xf32>, vector<8x32xf32> -> vector<8x32xf32>
    %9 = vector.extract_strided_slice %8 {offsets = [0, 0], sizes = [8, 8], strides = [1, 1]} : vector<8x32xf32> to vector<8x8xf32>
    %c0_10 = arith.constant 0 : index
    %c0_11 = arith.constant 0 : index
    %c0_12 = arith.constant 0 : index
    %10 = vector.load %arg5[%c0_10, %c0_11, %c0_12] : memref<4x8x16xf32, #tpu.memory_space<vmem>>, vector<1x8x16xf32>
    %11 = vector.shape_cast %10 : vector<1x8x16xf32> to vector<8x16xf32>
    %cst_13 = arith.constant dense<0.000000e+00> : vector<8x16xf32>
    %12 = tpu.matmul %9, %11, %cst_13 {dimension_numbers = #tpu.dot_dimension_numbers<[1], [0], [0], [1], [0, 0, 1, 1], [], []>} : vector<8x8xf32>, vector<8x16xf32>, vector<8x16xf32> -> vector<8x16xf32>
    %c0_14 = arith.constant 0 : index
    %c0_15 = arith.constant 0 : index
    %c0_16 = arith.constant 0 : index
    %c0_17 = arith.constant 0 : index
    %13 = vector.load %arg7[%c0_14, %c0_15, %c0_16, %c0_17] : memref<1x4x8x16xf32, #tpu.memory_space<vmem>>, vector<1x1x8x16xf32>
    %14 = vector.shape_cast %13 : vector<1x1x8x16xf32> to vector<8x16xf32>
    %15 = vector.shape_cast %12 : vector<8x16xf32> to vector<1x1x8x16xf32>
    tpu.vector_store %arg7[%c0_14, %c0_15, %c0_16, %c0_17], %15 {strides = array<i32>} : memref<1x4x8x16xf32, #tpu.memory_space<vmem>>, vector<1x1x8x16xf32>,
    %16 = vector.extract_strided_slice %8 {offsets = [0, 8], sizes = [8, 8], strides = [1, 1]} : vector<8x32xf32> to vector<8x8xf32>
    %c1 = arith.constant 1 : index
    %c0_18 = arith.constant 0 : index
    %c0_19 = arith.constant 0 : index
    %17 = vector.load %arg5[%c1, %c0_18, %c0_19] : memref<4x8x16xf32, #tpu.memory_space<vmem>>, vector<1x8x16xf32>
    %18 = vector.shape_cast %17 : vector<1x8x16xf32> to vector<8x16xf32>
    %cst_20 = arith.constant dense<0.000000e+00> : vector<8x16xf32>
    %19 = tpu.matmul %16, %18, %cst_20 {dimension_numbers = #tpu.dot_dimension_numbers<[1], [0], [0], [1], [0, 0, 1, 1], [], []>} : vector<8x8xf32>, vector<8x16xf32>, vector<8x16xf32> -> vector<8x16xf32>
    %c0_21 = arith.constant 0 : index
    %c1_22 = arith.constant 1 : index
    %c0_23 = arith.constant 0 : index
    %c0_24 = arith.constant 0 : index
    %20 = vector.load %arg7[%c0_21, %c1_22, %c0_23, %c0_24] : memref<1x4x8x16xf32, #tpu.memory_space<vmem>>, vector<1x1x8x16xf32>
    %21 = vector.shape_cast %20 : vector<1x1x8x16xf32> to vector<8x16xf32>
    %22 = vector.shape_cast %19 : vector<8x16xf32> to vector<1x1x8x16xf32>
    tpu.vector_store %arg7[%c0_21, %c1_22, %c0_23, %c0_24], %22 {strides = array<i32>} : memref<1x4x8x16xf32, #tpu.memory_space<vmem>>, vector<1x1x8x16xf32>,
    %23 = vector.extract_strided_slice %8 {offsets = [0, 16], sizes = [8, 8], strides = [1, 1]} : vector<8x32xf32> to vector<8x8xf32>
    %c2 = arith.constant 2 : index
    %c0_25 = arith.constant 0 : index
    %c0_26 = arith.constant 0 : index
    %24 = vector.load %arg5[%c2, %c0_25, %c0_26] : memref<4x8x16xf32, #tpu.memory_space<vmem>>, vector<1x8x16xf32>
    %25 = vector.shape_cast %24 : vector<1x8x16xf32> to vector<8x16xf32>
    %cst_27 = arith.constant dense<0.000000e+00> : vector<8x16xf32>
    %26 = tpu.matmul %23, %25, %cst_27 {dimension_numbers = #tpu.dot_dimension_numbers<[1], [0], [0], [1], [0, 0, 1, 1], [], []>} : vector<8x8xf32>, vector<8x16xf32>, vector<8x16xf32> -> vector<8x16xf32>
    %c0_28 = arith.constant 0 : index
    %c2_29 = arith.constant 2 : index
    %c0_30 = arith.constant 0 : index
    %c0_31 = arith.constant 0 : index
    %27 = vector.load %arg7[%c0_28, %c2_29, %c0_30, %c0_31] : memref<1x4x8x16xf32, #tpu.memory_space<vmem>>, vector<1x1x8x16xf32>
    %28 = vector.shape_cast %27 : vector<1x1x8x16xf32> to vector<8x16xf32>
    %29 = vector.shape_cast %26 : vector<8x16xf32> to vector<1x1x8x16xf32>
    tpu.vector_store %arg7[%c0_28, %c2_29, %c0_30, %c0_31], %29 {strides = array<i32>} : memref<1x4x8x16xf32, #tpu.memory_space<vmem>>, vector<1x1x8x16xf32>,
    %30 = vector.extract_strided_slice %8 {offsets = [0, 24], sizes = [8, 8], strides = [1, 1]} : vector<8x32xf32> to vector<8x8xf32>
    %c3 = arith.constant 3 : index
    %c0_32 = arith.constant 0 : index
    %c0_33 = arith.constant 0 : index
    %31 = vector.load %arg5[%c3, %c0_32, %c0_33] : memref<4x8x16xf32, #tpu.memory_space<vmem>>, vector<1x8x16xf32>
    %32 = vector.shape_cast %31 : vector<1x8x16xf32> to vector<8x16xf32>
    %cst_34 = arith.constant dense<0.000000e+00> : vector<8x16xf32>
    %33 = tpu.matmul %30, %32, %cst_34 {dimension_numbers = #tpu.dot_dimension_numbers<[1], [0], [0], [1], [0, 0, 1, 1], [], []>} : vector<8x8xf32>, vector<8x16xf32>, vector<8x16xf32> -> vector<8x16xf32>
    %c0_35 = arith.constant 0 : index
    %c3_36 = arith.constant 3 : index
    %c0_37 = arith.constant 0 : index
    %c0_38 = arith.constant 0 : index
    %34 = vector.load %arg7[%c0_35, %c3_36, %c0_37, %c0_38] : memref<1x4x8x16xf32, #tpu.memory_space<vmem>>, vector<1x1x8x16xf32>
    %35 = vector.shape_cast %34 : vector<1x1x8x16xf32> to vector<8x16xf32>
    %36 = vector.shape_cast %33 : vector<8x16xf32> to vector<1x1x8x16xf32>
    tpu.vector_store %arg7[%c0_35, %c3_36, %c0_37, %c0_38], %36 {strides = array<i32>} : memref<1x4x8x16xf32, #tpu.memory_space<vmem>>, vector<1x1x8x16xf32>,
    return
  }
  func.func @transform_0(%arg0: i32, %arg1: i32) -> (i32, i32, i32) {
    %c0_i32 = arith.constant 0 : i32
    %c0_i32_0 = arith.constant 0 : i32
    return %arg0, %arg1, %c0_i32 : i32, i32, i32
  }
  func.func @transform_1(%arg0: i32, %arg1: i32) -> (i32, i32) {
    %c0_i32 = arith.constant 0 : i32
    %c0_i32_0 = arith.constant 0 : i32
    %c0_i32_1 = arith.constant 0 : i32
    return %c0_i32, %c0_i32_0 : i32, i32
  }
  func.func @transform_2(%arg0: i32, %arg1: i32) -> (i32, i32) {
    %c0_i32 = arith.constant 0 : i32
    %c0_i32_0 = arith.constant 0 : i32
    %c0_i32_1 = arith.constant 0 : i32
    return %c0_i32, %c0_i32_0 : i32, i32
  }
  func.func @transform_3(%arg0: i32, %arg1: i32) -> (i32, i32, i32) {
    %c0_i32 = arith.constant 0 : i32
    %c0_i32_0 = arith.constant 0 : i32
    %c0_i32_1 = arith.constant 0 : i32
    %c0_i32_2 = arith.constant 0 : i32
    return %c0_i32, %c0_i32_0, %c0_i32_1 : i32, i32, i32
  }
  func.func @transform_4(%arg0: i32, %arg1: i32) -> (i32, i32, i32) {
    %c0_i32 = arith.constant 0 : i32
    %c0_i32_0 = arith.constant 0 : i32
    return %arg0, %arg1, %c0_i32 : i32, i32, i32
  }
  func.func @transform_5(%arg0: i32, %arg1: i32) -> (i32, i32, i32, i32) {
    %c0_i32 = arith.constant 0 : i32
    %c0_i32_0 = arith.constant 0 : i32
    %c0_i32_1 = arith.constant 0 : i32
    return %arg0, %c0_i32, %arg1, %c0_i32_0 : i32, i32, i32, i32
  }
}

</mosaic_0001>

<llo_original>
// kernel: tpu_custom_call.1
$region0: #{tpu_custom_call.1}
  #allocation0 [shape = 'u32[]', space=smem, size = 0x4, offset = 0x4, fixed_abs, tag = 'smem constant byte address 0x4 - core index']
  #allocation1 [shape = 'u32[144,128]{1,0:T(1,128)}', space=vmem, size = 0x12000, scoped, tag = 'internal scratch']
  %s0 = inlined_call_operand.vmem [shape: f32[2,24,32], index: 0, kind: input, shape index: {}]
  %s1 = inlined_call_operand.hbm [shape: f32[32,32], index: 1, kind: input, shape index: {}]
  %s2 = inlined_call_operand.vmem [shape: f32[32,16], index: 2, kind: input, shape index: {}]
  %s3 = inlined_call_operand.hbm [shape: f32[4,8,16], index: 3, kind: input, shape index: {}]
  %s4 = inlined_call_operand.vmem [shape: f32[2,24,16], index: 4, kind: output, shape index: {0}]
  %s5 = inlined_call_operand.vmem [shape: f32[2,4,24,16], index: 5, kind: output, shape index: {1}]
  %6 = xla_tuple %s4, %s5
  %s7 = sld [smem:[#allocation0]]
  $region99: #{tpu_custom_call.1} parent=0
    _
  %s9 = ssub.s32 1, %s7
  %s10 = scalar_select 0, %s9, %s7
  $region1: #{tpu_custom_call.1} parent=0
    #allocation2 [shape = 'u8[16384]{0}', space=vmem, size = 0x4000, scoped, tag = 'input window, operand 1, single buffered']
    #allocation3 [shape = 's32[2]{0}', space=sflag, size = 0x8, scoped, tag = 'scoped memory for tpu_custom_call.1']
    #allocation4 [shape = 'u8[16384]{0}', space=vmem, size = 0x4000, scoped, tag = 'input window, operand 3, single buffered']
    #allocation5 [shape = 's32[1]{0}', space=sflag, size = 0x4, scoped, tag = 'scoped memory for tpu_custom_call.1']
    #allocation6 [shape = 'u8[32768]{0}', space=vmem, size = 0x8000, scoped, tag = 'output window, operand 1']
    %11 = vsyncpa [#allocation3], 0
    %12 = vsyncpa [#allocation5], 0
    loop: start=0, step=1, limit=8
    $region2: #{tpu_custom_call.1} parent=1 // loop_pre_header
      _
    $region3: #{tpu_custom_call.1} parent=1 // loop_header
      %s14 = sphi 0, %s18
      %p15 = scmp.ge.s32.totalorder %s14, 8
      %s21 = sphi 0, %s33
      %s22 = sphi 0, %s29
      %s23 = sphi 0, %s21
      %s24 = sphi 0, %s22
      %s25 = sphi 0, %s23
      %s26 = sphi 0, %s24
      %s38 = sphi 0, %s40
      %s41 = sphi 0, %s38
      %s42 = sphi 0, %s41
      %s58 = sphi 0, %s42
      %s62 = sphi 0, %s62
      %s64 = sphi 0, %s62
      %s65 = sphi 0, %s64
      %s79 = sphi 0, %s65
      %s83 = sphi 0, %s83
      %s85 = sphi 0, %s83
      %s86 = sphi 0, %s85
      %s100 = sphi 0, %s86
      %s104 = sphi 0, %s104
      %s106 = sphi 0, %s104
      %s107 = sphi 0, %s106
      %s121 = sphi 0, %s107
      %s129 = sphi 0, %s131
      %s132 = sphi 0, %s129
      %s133 = sphi 0, %s132
      %s149 = sphi 0, %s133
      %s157 = sphi 0, %s159
      %s160 = sphi 0, %s157
      %s161 = sphi 0, %s160
      %s177 = sphi 0, %s161
    $region4: #{tpu_custom_call.1} parent=1 // loop_header_branch
      %17 = sbr.rel (%p15) target = $region8
    $region5: #{tpu_custom_call.1} parent=1 // loop_body
      %s19 = ssub.s32 %s14, 1
      %s20 = ssub.s32 %s14, 2
      %s27 = sadd.s32 1, %s22
      %p28 = scmp.ge.s32.totalorder %s27, 3
      %s29 = scalar_select %p28, 0, %s27
      %s30 = sadd.s32 1, %s21
      %s31 = scalar_select %p28, %s30, %s21
      %p32 = scmp.ge.s32.totalorder %s31, 2
      %s33 = scalar_select %p32, 0, %s31
      %s34 = ssub.s32 %s21, %s33
      %s35 = ssub.s32 %s22, %s29
      %s36 = sor.u32 %s34, %s35
      %p37 = scmp.eq.s32.totalorder %s36, 0
      %s39 = sadd.s32 %s38, 1
      %s40 = scalar_select %p37, %s38, %s39
      %p43 = pneg %p37
      %p44 = scmp.eq.s32.totalorder %s14, 5
      %p45 = por %p43, %p44
      %p46 = scmp.ne.s32.totalorder %s38, %s41
      %p47 = scmp.eq.s32.totalorder %s14, 0
      %p48 = por %p46, %p47
      %p49 = scmp.ne.s32.totalorder %s38, %s41
      %p50 = scmp.eq.s32.totalorder %s19, 5
      %p51 = por %p49, %p50
      %p52 = scmp.ne.s32.totalorder %s41, %s42
      %p53 = scmp.eq.s32.totalorder %s19, 0
      %p54 = por %p52, %p53
      %p55 = scmp.ne.s32.totalorder %s41, %s42
      %p56 = scmp.eq.s32.totalorder %s20, 5
      %p57 = por %p55, %p56
      %p59 = scmp.ne.s32.totalorder %s42, %s58
      %p60 = scmp.eq.s32.totalorder %s20, 0
      %p61 = por %p59, %p60
      %s63 = sadd.s32 %s62, 1
      %p66 = scmp.eq.s32.totalorder %s14, 5
      %p67 = scmp.ne.s32.totalorder %s62, %s64
      %p68 = scmp.eq.s32.totalorder %s14, 0
      %p69 = por %p67, %p68
      %p70 = scmp.ne.s32.totalorder %s62, %s64
      %p71 = scmp.eq.s32.totalorder %s19, 5
      %p72 = por %p70, %p71
      %p73 = scmp.ne.s32.totalorder %s64, %s65
      %p74 = scmp.eq.s32.totalorder %s19, 0
      %p75 = por %p73, %p74
      %p76 = scmp.ne.s32.totalorder %s64, %s65
      %p77 = scmp.eq.s32.totalorder %s20, 5
      %p78 = por %p76, %p77
      %p80 = scmp.ne.s32.totalorder %s65, %s79
      %p81 = scmp.eq.s32.totalorder %s20, 0
      %p82 = por %p80, %p81
      %s84 = sadd.s32 %s83, 1
      %p87 = scmp.eq.s32.totalorder %s14, 5
      %p88 = scmp.ne.s32.totalorder %s83, %s85
      %p89 = scmp.eq.s32.totalorder %s14, 0
      %p90 = por %p88, %p89
      %p91 = scmp.ne.s32.totalorder %s83, %s85
      %p92 = scmp.eq.s32.totalorder %s19, 5
      %p93 = por %p91, %p92
      %p94 = scmp.ne.s32.totalorder %s85, %s86
      %p95 = scmp.eq.s32.totalorder %s19, 0
      %p96 = por %p94, %p95
      %p97 = scmp.ne.s32.totalorder %s85, %s86
      %p98 = scmp.eq.s32.totalorder %s20, 5
      %p99 = por %p97, %p98
      %p101 = scmp.ne.s32.totalorder %s86, %s100
      %p102 = scmp.eq.s32.totalorder %s20, 0
      %p103 = por %p101, %p102
      %s105 = sadd.s32 %s104, 1
      %p108 = scmp.eq.s32.totalorder %s14, 5
      %p109 = scmp.ne.s32.totalorder %s104, %s106
      %p110 = scmp.eq.s32.totalorder %s14, 0
      %p111 = por %p109, %p110
      %p112 = scmp.ne.s32.totalorder %s104, %s106
      %p113 = scmp.eq.s32.totalorder %s19, 5
      %p114 = por %p112, %p113
      %p115 = scmp.ne.s32.totalorder %s106, %s107
      %p116 = scmp.eq.s32.totalorder %s19, 0
      %p117 = por %p115, %p116
      %p118 = scmp.ne.s32.totalorder %s106, %s107
      %p119 = scmp.eq.s32.totalorder %s20, 5
      %p120 = por %p118, %p119
      %p122 = scmp.ne.s32.totalorder %s107, %s121
      %p123 = scmp.eq.s32.totalorder %s20, 0
      %p124 = por %p122, %p123
      %s125 = ssub.s32 %s21, %s33
      %s126 = ssub.s32 %s22, %s29
      %s127 = sor.u32 %s125, %s126
      %p128 = scmp.eq.s32.totalorder %s127, 0
      %s130 = sadd.s32 %s129, 1
      %s131 = scalar_select %p128, %s129, %s130
      %p134 = pneg %p128
      %p135 = scmp.eq.s32.totalorder %s14, 5
      %p136 = por %p134, %p135
      %p137 = scmp.ne.s32.totalorder %s129, %s132
      %p138 = scmp.eq.s32.totalorder %s14, 0
      %p139 = por %p137, %p138
      %p140 = scmp.ne.s32.totalorder %s129, %s132
      %p141 = scmp.eq.s32.totalorder %s19, 5
      %p142 = por %p140, %p141
      %p143 = scmp.ne.s32.totalorder %s132, %s133
      %p144 = scmp.eq.s32.totalorder %s19, 0
      %p145 = por %p143, %p144
      %p146 = scmp.ne.s32.totalorder %s132, %s133
      %p147 = scmp.eq.s32.totalorder %s20, 5
      %p148 = por %p146, %p147
      %p150 = scmp.ne.s32.totalorder %s133, %s149
      %p151 = scmp.eq.s32.totalorder %s20, 0
      %p152 = por %p150, %p151
      %s153 = ssub.s32 %s21, %s33
      %s154 = ssub.s32 %s22, %s29
      %s155 = sor.u32 %s153, %s154
      %p156 = scmp.eq.s32.totalorder %s155, 0
      %s158 = sadd.s32 %s157, 1
      %s159 = scalar_select %p156, %s157, %s158
      %p162 = pneg %p156
      %p163 = scmp.eq.s32.totalorder %s14, 5
      %p164 = por %p162, %p163
      %p165 = scmp.ne.s32.totalorder %s157, %s160
      %p166 = scmp.eq.s32.totalorder %s14, 0
      %p167 = por %p165, %p166
      %p168 = scmp.ne.s32.totalorder %s157, %s160
      %p169 = scmp.eq.s32.totalorder %s19, 5
      %p170 = por %p168, %p169
      %p171 = scmp.ne.s32.totalorder %s160, %s161
      %p172 = scmp.eq.s32.totalorder %s19, 0
      %p173 = por %p171, %p172
      %p174 = scmp.ne.s32.totalorder %s160, %s161
      %p175 = scmp.eq.s32.totalorder %s20, 5
      %p176 = por %p174, %p175
      %p178 = scmp.ne.s32.totalorder %s161, %s177
      %p179 = scmp.eq.s32.totalorder %s20, 0
      %p180 = por %p178, %p179
      %p181 = scmp.le.s32.totalorder 1, %s14
      %p182 = scmp.lt.s32.totalorder %s14, 7
      %p183 = pnand %p181, %p182
      %p184 = pneg %p183
      // Predicated region
      $region9: #{tpu_custom_call.1} parent=5 // pred_check
        _
      $region10: #{tpu_custom_call.1} parent=5 // pred_check_branch
        %186 = sbr.rel (%p183) target = $region12
      $region11: #{tpu_custom_call.1} parent=5 // pred_region
        %s187 = ssub.s32 %s14, 1
        // Predicated region
        $region13: #{tpu_custom_call.1} parent=11 // pred_check
          %p188 = pneg %p75
        $region14: #{tpu_custom_call.1} parent=11 // pred_check_branch
          %190 = sbr.rel (%p188) target = $region16
        $region15: #{tpu_custom_call.1} parent=11 // pred_region
          %s192 = ssub.s32 512, 512
          %193 = vsyncadd [#allocation3], %s192
          %s194 = sshll.u32 [#allocation2], 4
          %s195 = int_to_ptr.vmem [resolvable:$true] %s194
          %200 = dma.hbm_to_vmem [thread:$0]  %s1, 512, %s195, [#allocation3], 128, 128, 8
        $region16: #{tpu_custom_call.1} parent=11 // pred_fallthru
          _
        // Predicated region
        $region17: #{tpu_custom_call.1} parent=11 // pred_check
          %p201 = pneg %p96
        $region18: #{tpu_custom_call.1} parent=11 // pred_check_branch
          %203 = sbr.rel (%p201) target = $region20
        $region19: #{tpu_custom_call.1} parent=11 // pred_region
          _
        $region20: #{tpu_custom_call.1} parent=11 // pred_fallthru
          _
        // Predicated region
        $region21: #{tpu_custom_call.1} parent=11 // pred_check
          %p204 = pneg %p117
        $region22: #{tpu_custom_call.1} parent=11 // pred_check_branch
          %206 = sbr.rel (%p204) target = $region24
        $region23: #{tpu_custom_call.1} parent=11 // pred_region
          %s208 = ssub.s32 512, 512
          %209 = vsyncadd [#allocation5], %s208
          %s210 = sshll.u32 [#allocation4], 4
          %s211 = int_to_ptr.vmem [resolvable:$true] %s210
          %216 = dma.hbm_to_vmem [thread:$0]  %s3, 512, %s211, [#allocation5], 128, 128, 8
        $region24: #{tpu_custom_call.1} parent=11 // pred_fallthru
          _
      $region12: #{tpu_custom_call.1} parent=5 // pred_fallthru
        _
      %p217 = scmp.lt.s32.totalorder %s14, 6
      // Predicated region
      $region25: #{tpu_custom_call.1} parent=5 // pred_check
        %p218 = pneg %p217
      $region26: #{tpu_custom_call.1} parent=5 // pred_check_branch
        %220 = sbr.rel (%p218) target = $region28
      $region27: #{tpu_custom_call.1} parent=5 // pred_region
        // Predicated region
        $region29: #{tpu_custom_call.1} parent=27 // pred_check
          %p221 = pneg %p48
        $region30: #{tpu_custom_call.1} parent=27 // pred_check_branch
          %223 = sbr.rel (%p221) target = $region32
        $region31: #{tpu_custom_call.1} parent=27 // pred_region
          %p224 = scmp.lt.s32.totalorder %s21, 1
          %s225 = scalar_select %p224, %s21, 1
          %p226 = scmp.lt.s32.totalorder %s22, 2
          %s227 = scalar_select %p226, %s22, 2
          %s228 = smul.addr %s225, 3
          %s229 = sadd.s32 %s227, %s228
          %s230 = smul.addr %s229, 8
          %s231 = scalar_lea.vmem %s0, %s230
        $region32: #{tpu_custom_call.1} parent=27 // pred_fallthru
          _
      $region28: #{tpu_custom_call.1} parent=5 // pred_fallthru
        _
      %p232 = scmp.le.s32.totalorder 1, %s14
      %p233 = scmp.lt.s32.totalorder %s14, 7
      %p234 = pnand %p232, %p233
      %p235 = pneg %p234
      // Predicated region
      $region33: #{tpu_custom_call.1} parent=5 // pred_check
        _
      $region34: #{tpu_custom_call.1} parent=5 // pred_check_branch
        %237 = sbr.rel (%p234) target = $region36
      $region35: #{tpu_custom_call.1} parent=5 // pred_region
        %s238 = ssub.s32 %s14, 1
        // Predicated region
        $region37: #{tpu_custom_call.1} parent=35 // pred_check
          %p239 = pneg %p75
        $region38: #{tpu_custom_call.1} parent=35 // pred_check_branch
          %241 = sbr.rel (%p239) target = $region40
        $region39: #{tpu_custom_call.1} parent=35 // pred_region
          %242 = dma.done [#allocation3], 512
        $region40: #{tpu_custom_call.1} parent=35 // pred_fallthru
          _
        // Predicated region
        $region41: #{tpu_custom_call.1} parent=35 // pred_check
          %p243 = pneg %p117
        $region42: #{tpu_custom_call.1} parent=35 // pred_check_branch
          %245 = sbr.rel (%p243) target = $region44
        $region43: #{tpu_custom_call.1} parent=35 // pred_region
          %246 = dma.done [#allocation5], 512
        $region44: #{tpu_custom_call.1} parent=35 // pred_fallthru
          _
        %p247 = scmp.lt.s32.totalorder %s23, 1
        %s248 = scalar_select %p247, %s23, 1
        %p249 = scmp.lt.s32.totalorder %s24, 2
        %s250 = scalar_select %p249, %s24, 2
        %s251 = smul.addr %s248, 3
        %s252 = sadd.s32 %s250, %s251
        %s253 = smul.addr %s252, 8
        %s254 = scalar_lea.vmem %s0, %s253
        %p255 = pneg %p54
        %p256 = pneg %p51
        %p257 = pneg %p75
        %p258 = pneg %p72
        %p259 = pneg %p96
        %p260 = pneg %p93
        %p261 = pneg %p117
        %p262 = pneg %p114
        %p263 = pneg %p145
        %p264 = pneg %p142
        %p265 = scmp.lt.s32.totalorder %s23, 1
        %s266 = scalar_select %p265, %s23, 1
        %p267 = scmp.lt.s32.totalorder %s24, 2
        %s268 = scalar_select %p267, %s24, 2
        %s269 = smul.addr %s266, 3
        %s270 = sadd.s32 %s268, %s269
        %s271 = smul.addr %s270, 8
        %s272 = scalar_lea.vmem %s4, %s271
        %p273 = pneg %p173
        %p274 = pneg %p170
        %s275 = sand.u32 %s160, 1
        %s276 = sand.u32 %s160, 1
        %s277 = smul.addr %s276, 32
        %s278 = scalar_lea.vmem [#allocation6], %s277
        %p279 = scmp.lt.s32.totalorder %s23, 1
        %s280 = scalar_select %p279, %s23, 1
        %p281 = scmp.lt.s32.totalorder %s24, 2
        %s282 = scalar_select %p281, %s24, 2
        %s283 = smul.addr %s280, 3
        %s284 = sadd.s32 %s282, %s283
        %s285 = smul.addr %s284, 8
        %s286 = scalar_lea.vmem %s0, %s285
        %p287 = scmp.lt.s32.totalorder %s23, 1
        %s288 = scalar_select %p287, %s23, 1
        %p289 = scmp.lt.s32.totalorder %s24, 2
        %s290 = scalar_select %p289, %s24, 2
        %s291 = smul.addr %s288, 3
        %s292 = sadd.s32 %s290, %s291
        %s293 = smul.addr %s292, 8
        %s294 = scalar_lea.vmem %s4, %s293
        %v295 = vld [vmem:[%s286] sm:$0xff]
        %v296 = vld [vmem:[%s2] sm:$0xff]
        %v297 = vld [vmem:[%s2 + $0x8] sm:$0xff]
        %v298 = vld [vmem:[%s2 + $0x10] sm:$0xff]
        %v299 = vld [vmem:[%s2 + $0x18] sm:$0xff]
        %vm300 = vcmask 261120
        %v302 = vsel %vm300, %v295, 0
        %304 = vmatprep.subr.mxu0 0.0
        %305 = vmatpush1.msra.mxu0 0.0
        %306 = vmatprep.subr.mxu0 0.0
        %307 = vmatpush1.msra.mxu0 0.0
        %308 = vmatprep.subr.mxu0 0.0
        %309 = vmatpush1.msra.mxu0 0.0
        %310 = vmatprep.subr.mxu0 0.0
        %311 = vmatpush1.msra.mxu0 0.0
        %312 = vmatprep.subr.mxu0 0.0
        %313 = vmatpush1.msra.mxu0 0.0
        %314 = vmatprep.subr.mxu0 0.0
        %315 = vmatpush1.msra.mxu0 0.0
        %316 = vmatprep.subr.mxu0 0.0
        %317 = vmatpush1.msra.mxu0 0.0
        %318 = vmatprep.subr.mxu0 0.0
        %319 = vmatpush1.msra.mxu0 0.0
        %320 = vmatprep.subr.mxu0 0.0
        %321 = vmatpush1.msra.mxu0 0.0
        %322 = vmatprep.subr.mxu0 0.0
        %323 = vmatpush1.msra.mxu0 0.0
        %324 = vmatprep.subr.mxu0 0.0
        %325 = vmatpush1.msra.mxu0 0.0
        %326 = vmatprep.subr.mxu0 0.0
        %327 = vmatpush1.msra.mxu0 0.0
        %328 = vmatprep.subr.mxu0 0.0
        %329 = vmatpush1.msra.mxu0 %v299
        %330 = vmatprep.subr.mxu0 0.0
        %331 = vmatpush1.msra.mxu0 %v298
        %332 = vmatprep.subr.mxu0 0.0
        %333 = vmatpush1.msra.mxu0 %v297
        %334 = vmatprep.subr.mxu0 0.0
        %335 = vmatpush1.msra.mxu0 %v296
        %336 = vmatprep.subr.mxu0 0.0
        %337 = vmatpush2.msra.mxu0 0.0
        %338 = vmatprep.subr.mxu0 0.0
        %339 = vmatpush2.msra.mxu0 0.0
        %340 = vmatprep.subr.mxu0 0.0
        %341 = vmatpush2.msra.mxu0 0.0
        %342 = vmatprep.subr.mxu0 0.0
        %343 = vmatpush2.msra.mxu0 0.0
        %344 = vmatprep.subr.mxu0 0.0
        %345 = vmatpush2.msra.mxu0 0.0
        %346 = vmatprep.subr.mxu0 0.0
        %347 = vmatpush2.msra.mxu0 0.0
        %348 = vmatprep.subr.mxu0 0.0
        %349 = vmatpush2.msra.mxu0 0.0
        %350 = vmatprep.subr.mxu0 0.0
        %351 = vmatpush2.msra.mxu0 0.0
        %352 = vmatprep.subr.mxu0 0.0
        %353 = vmatpush2.msra.mxu0 0.0
        %354 = vmatprep.subr.mxu0 0.0
        %355 = vmatpush2.msra.mxu0 0.0
        %356 = vmatprep.subr.mxu0 0.0
        %357 = vmatpush2.msra.mxu0 0.0
        %358 = vmatprep.subr.mxu0 0.0
        %359 = vmatpush2.msra.mxu0 0.0
        %360 = vmatprep.subr.mxu0 0.0
        %361 = vmatpush2.msra.mxu0 0.0
        %362 = vmatprep.subr.mxu0 0.0
        %363 = vmatpush2.msra.mxu0 0.0
        %364 = vmatprep.subr.mxu0 0.0
        %365 = vmatpush2.msra.mxu0 0.0
        %366 = vmatprep.subr.mxu0 0.0
        %367 = vmatpush2.msra.mxu0 0.0
        %368 = vmatprep.mubr.f32.mxu0 0.0
        %369 = vmatmul.mubr.f32.gmra.mxu0 %v302
        %v370 = vpop.f32.mrf.mxu0
        %v371 = vadd.f32 0.0, %v370
        %v372 = vpop.f32.mrf.mxu0
        %373 = vdwg.mxu0
        %vm374 = vcmask 130048
        %375 = vst.msk [vmem:[%s294] sm:$0xff] %vm374, %v371
        %v376 = vld [vmem:[#allocation2] sm:$0xff]
        %v377 = vld [vmem:[#allocation2 + $0x8] sm:$0xff]
        %v378 = vld [vmem:[#allocation2 + $0x10] sm:$0xff]
        %v379 = vld [vmem:[#allocation2 + $0x18] sm:$0xff]
        %380 = vmatprep.subr.mxu0 0.0
        %381 = vmatpush1.msra.mxu0 0.0
        %382 = vmatprep.subr.mxu0 0.0
        %383 = vmatpush1.msra.mxu0 0.0
        %384 = vmatprep.subr.mxu0 0.0
        %385 = vmatpush1.msra.mxu0 0.0
        %386 = vmatprep.subr.mxu0 0.0
        %387 = vmatpush1.msra.mxu0 0.0
        %388 = vmatprep.subr.mxu0 0.0
        %389 = vmatpush1.msra.mxu0 0.0
        %390 = vmatprep.subr.mxu0 0.0
        %391 = vmatpush1.msra.mxu0 0.0
        %392 = vmatprep.subr.mxu0 0.0
        %393 = vmatpush1.msra.mxu0 0.0
        %394 = vmatprep.subr.mxu0 0.0
        %395 = vmatpush1.msra.mxu0 0.0
        %396 = vmatprep.subr.mxu0 0.0
        %397 = vmatpush1.msra.mxu0 0.0
        %398 = vmatprep.subr.mxu0 0.0
        %399 = vmatpush1.msra.mxu0 0.0
        %400 = vmatprep.subr.mxu0 0.0
        %401 = vmatpush1.msra.mxu0 0.0
        %402 = vmatprep.subr.mxu0 0.0
        %403 = vmatpush1.msra.mxu0 0.0
        %404 = vmatprep.subr.mxu0 0.0
        %405 = vmatpush1.msra.mxu0 %v379
        %406 = vmatprep.subr.mxu0 0.0
        %407 = vmatpush1.msra.mxu0 %v378
        %408 = vmatprep.subr.mxu0 0.0
        %409 = vmatpush1.msra.mxu0 %v377
        %410 = vmatprep.subr.mxu0 0.0
        %411 = vmatpush1.msra.mxu0 %v376
        %412 = vmatprep.subr.mxu0 0.0
        %413 = vmatpush2.msra.mxu0 0.0
        %414 = vmatprep.subr.mxu0 0.0
        %415 = vmatpush2.msra.mxu0 0.0
        %416 = vmatprep.subr.mxu0 0.0
        %417 = vmatpush2.msra.mxu0 0.0
        %418 = vmatprep.subr.mxu0 0.0
        %419 = vmatpush2.msra.mxu0 0.0
        %420 = vmatprep.subr.mxu0 0.0
        %421 = vmatpush2.msra.mxu0 0.0
        %422 = vmatprep.subr.mxu0 0.0
        %423 = vmatpush2.msra.mxu0 0.0
        %424 = vmatprep.subr.mxu0 0.0
        %425 = vmatpush2.msra.mxu0 0.0
        %426 = vmatprep.subr.mxu0 0.0
        %427 = vmatpush2.msra.mxu0 0.0
        %428 = vmatprep.subr.mxu0 0.0
        %429 = vmatpush2.msra.mxu0 0.0
        %430 = vmatprep.subr.mxu0 0.0
        %431 = vmatpush2.msra.mxu0 0.0
        %432 = vmatprep.subr.mxu0 0.0
        %433 = vmatpush2.msra.mxu0 0.0
        %434 = vmatprep.subr.mxu0 0.0
        %435 = vmatpush2.msra.mxu0 0.0
        %436 = vmatprep.subr.mxu0 0.0
        %437 = vmatpush2.msra.mxu0 0.0
        %438 = vmatprep.subr.mxu0 0.0
        %439 = vmatpush2.msra.mxu0 0.0
        %440 = vmatprep.subr.mxu0 0.0
        %441 = vmatpush2.msra.mxu0 0.0
        %442 = vmatprep.subr.mxu0 0.0
        %443 = vmatpush2.msra.mxu0 0.0
        %444 = vmatprep.mubr.f32.mxu0 0.0
        %445 = vmatmul.mubr.f32.gmra.mxu0 %v302
        %v446 = vpop.f32.mrf.mxu0
        %v447 = vadd.f32 0.0, %v446
        %v448 = vpop.f32.mrf.mxu0
        %449 = vdwg.mxu0
        %v450 = vld [vmem:[#allocation4] sm:$0xff]
        %vm451 = vcmask 64512
        %v453 = vsel %vm451, %v447, 0
        %455 = vmatprep.subr.mxu0 0.0
        %456 = vmatpush1.msra.mxu0 0.0
        %457 = vmatprep.subr.mxu0 0.0
        %458 = vmatpush1.msra.mxu0 0.0
        %459 = vmatprep.subr.mxu0 0.0
        %460 = vmatpush1.msra.mxu0 0.0
        %461 = vmatprep.subr.mxu0 0.0
        %462 = vmatpush1.msra.mxu0 0.0
        %463 = vmatprep.subr.mxu0 0.0
        %464 = vmatpush1.msra.mxu0 0.0
        %465 = vmatprep.subr.mxu0 0.0
        %466 = vmatpush1.msra.mxu0 0.0
        %467 = vmatprep.subr.mxu0 0.0
        %468 = vmatpush1.msra.mxu0 0.0
        %469 = vmatprep.subr.mxu0 0.0
        %470 = vmatpush1.msra.mxu0 0.0
        %471 = vmatprep.subr.mxu0 0.0
        %472 = vmatpush1.msra.mxu0 0.0
        %473 = vmatprep.subr.mxu0 0.0
        %474 = vmatpush1.msra.mxu0 0.0
        %475 = vmatprep.subr.mxu0 0.0
        %476 = vmatpush1.msra.mxu0 0.0
        %477 = vmatprep.subr.mxu0 0.0
        %478 = vmatpush1.msra.mxu0 0.0
        %479 = vmatprep.subr.mxu0 0.0
        %480 = vmatpush1.msra.mxu0 0.0
        %481 = vmatprep.subr.mxu0 0.0
        %482 = vmatpush1.msra.mxu0 0.0
        %483 = vmatprep.subr.mxu0 0.0
        %484 = vmatpush1.msra.mxu0 0.0
        %485 = vmatprep.subr.mxu0 0.0
        %486 = vmatpush1.msra.mxu0 %v450
        %487 = vmatprep.subr.mxu0 0.0
        %488 = vmatpush2.msra.mxu0 0.0
        %489 = vmatprep.subr.mxu0 0.0
        %490 = vmatpush2.msra.mxu0 0.0
        %491 = vmatprep.subr.mxu0 0.0
        %492 = vmatpush2.msra.mxu0 0.0
        %493 = vmatprep.subr.mxu0 0.0
        %494 = vmatpush2.msra.mxu0 0.0
        %495 = vmatprep.subr.mxu0 0.0
        %496 = vmatpush2.msra.mxu0 0.0
        %497 = vmatprep.subr.mxu0 0.0
        %498 = vmatpush2.msra.mxu0 0.0
        %499 = vmatprep.subr.mxu0 0.0
        %500 = vmatpush2.msra.mxu0 0.0
        %501 = vmatprep.subr.mxu0 0.0
        %502 = vmatpush2.msra.mxu0 0.0
        %503 = vmatprep.subr.mxu0 0.0
        %504 = vmatpush2.msra.mxu0 0.0
        %505 = vmatprep.subr.mxu0 0.0
        %506 = vmatpush2.msra.mxu0 0.0
        %507 = vmatprep.subr.mxu0 0.0
        %508 = vmatpush2.msra.mxu0 0.0
        %509 = vmatprep.subr.mxu0 0.0
        %510 = vmatpush2.msra.mxu0 0.0
        %511 = vmatprep.subr.mxu0 0.0
        %512 = vmatpush2.msra.mxu0 0.0
        %513 = vmatprep.subr.mxu0 0.0
        %514 = vmatpush2.msra.mxu0 0.0
        %515 = vmatprep.subr.mxu0 0.0
        %516 = vmatpush2.msra.mxu0 0.0
        %517 = vmatprep.subr.mxu0 0.0
        %518 = vmatpush2.msra.mxu0 0.0
        %519 = vmatprep.mubr.f32.mxu0 0.0
        %520 = vmatmul.mubr.f32.gmra.mxu0 %v453
        %v521 = vpop.f32.mrf.mxu0
        %v522 = vadd.f32 0.0, %v521
        %v523 = vpop.f32.mrf.mxu0
        %524 = vdwg.mxu0
        %525 = vst.msk [vmem:[%s278] sm:$0xff] %vm374, %v522
        %s526 = scalar_lea.vmem [#allocation4], 8
        %v527 = vld [vmem:[%s526] sm:$0xff]
        %528 = vrot.lane.b32.xlu0 %v447, 120
        %v529 = vpop.permute.xlu0 %528
        %v530 = vsel %vm451, %v529, 0
        %532 = vmatprep.subr.mxu0 0.0
        %533 = vmatpush1.msra.mxu0 0.0
        %534 = vmatprep.subr.mxu0 0.0
        %535 = vmatpush1.msra.mxu0 0.0
        %536 = vmatprep.subr.mxu0 0.0
        %537 = vmatpush1.msra.mxu0 0.0
        %538 = vmatprep.subr.mxu0 0.0
        %539 = vmatpush1.msra.mxu0 0.0
        %540 = vmatprep.subr.mxu0 0.0
        %541 = vmatpush1.msra.mxu0 0.0
        %542 = vmatprep.subr.mxu0 0.0
        %543 = vmatpush1.msra.mxu0 0.0
        %544 = vmatprep.subr.mxu0 0.0
        %545 = vmatpush1.msra.mxu0 0.0
        %546 = vmatprep.subr.mxu0 0.0
        %547 = vmatpush1.msra.mxu0 0.0
        %548 = vmatprep.subr.mxu0 0.0
        %549 = vmatpush1.msra.mxu0 0.0
        %550 = vmatprep.subr.mxu0 0.0
        %551 = vmatpush1.msra.mxu0 0.0
        %552 = vmatprep.subr.mxu0 0.0
        %553 = vmatpush1.msra.mxu0 0.0
        %554 = vmatprep.subr.mxu0 0.0
        %555 = vmatpush1.msra.mxu0 0.0
        %556 = vmatprep.subr.mxu0 0.0
        %557 = vmatpush1.msra.mxu0 0.0
        %558 = vmatprep.subr.mxu0 0.0
        %559 = vmatpush1.msra.mxu0 0.0
        %560 = vmatprep.subr.mxu0 0.0
        %561 = vmatpush1.msra.mxu0 0.0
        %562 = vmatprep.subr.mxu0 0.0
        %563 = vmatpush1.msra.mxu0 %v527
        %564 = vmatprep.subr.mxu0 0.0
        %565 = vmatpush2.msra.mxu0 0.0
        %566 = vmatprep.subr.mxu0 0.0
        %567 = vmatpush2.msra.mxu0 0.0
        %568 = vmatprep.subr.mxu0 0.0
        %569 = vmatpush2.msra.mxu0 0.0
        %570 = vmatprep.subr.mxu0 0.0
        %571 = vmatpush2.msra.mxu0 0.0
        %572 = vmatprep.subr.mxu0 0.0
        %573 = vmatpush2.msra.mxu0 0.0
        %574 = vmatprep.subr.mxu0 0.0
        %575 = vmatpush2.msra.mxu0 0.0
        %576 = vmatprep.subr.mxu0 0.0
        %577 = vmatpush2.msra.mxu0 0.0
        %578 = vmatprep.subr.mxu0 0.0
        %579 = vmatpush2.msra.mxu0 0.0
        %580 = vmatprep.subr.mxu0 0.0
        %581 = vmatpush2.msra.mxu0 0.0
        %582 = vmatprep.subr.mxu0 0.0
        %583 = vmatpush2.msra.mxu0 0.0
        %584 = vmatprep.subr.mxu0 0.0
        %585 = vmatpush2.msra.mxu0 0.0
        %586 = vmatprep.subr.mxu0 0.0
        %587 = vmatpush2.msra.mxu0 0.0
        %588 = vmatprep.subr.mxu0 0.0
        %589 = vmatpush2.msra.mxu0 0.0
        %590 = vmatprep.subr.mxu0 0.0
        %591 = vmatpush2.msra.mxu0 0.0
        %592 = vmatprep.subr.mxu0 0.0
        %593 = vmatpush2.msra.mxu0 0.0
        %594 = vmatprep.subr.mxu0 0.0
        %595 = vmatpush2.msra.mxu0 0.0
        %596 = vmatprep.mubr.f32.mxu0 0.0
        %597 = vmatmul.mubr.f32.gmra.mxu0 %v530
        %v598 = vpop.f32.mrf.mxu0
        %v599 = vadd.f32 0.0, %v598
        %v600 = vpop.f32.mrf.mxu0
        %601 = vdwg.mxu0
        %s602 = scalar_lea.vmem %s278, 8 [#allocation6]
        %603 = vst.msk [vmem:[%s602] sm:$0xff] %vm374, %v599
        %s604 = scalar_lea.vmem [#allocation4], 16
        %v605 = vld [vmem:[%s604] sm:$0xff]
        %606 = vrot.lane.b32.xlu0 %v447, 112
        %v607 = vpop.permute.xlu0 %606
        %v608 = vsel %vm451, %v607, 0
        %610 = vmatprep.subr.mxu0 0.0
        %611 = vmatpush1.msra.mxu0 0.0
        %612 = vmatprep.subr.mxu0 0.0
        %613 = vmatpush1.msra.mxu0 0.0
        %614 = vmatprep.subr.mxu0 0.0
        %615 = vmatpush1.msra.mxu0 0.0
        %616 = vmatprep.subr.mxu0 0.0
        %617 = vmatpush1.msra.mxu0 0.0
        %618 = vmatprep.subr.mxu0 0.0
        %619 = vmatpush1.msra.mxu0 0.0
        %620 = vmatprep.subr.mxu0 0.0
        %621 = vmatpush1.msra.mxu0 0.0
        %622 = vmatprep.subr.mxu0 0.0
        %623 = vmatpush1.msra.mxu0 0.0
        %624 = vmatprep.subr.mxu0 0.0
        %625 = vmatpush1.msra.mxu0 0.0
        %626 = vmatprep.subr.mxu0 0.0
        %627 = vmatpush1.msra.mxu0 0.0
        %628 = vmatprep.subr.mxu0 0.0
        %629 = vmatpush1.msra.mxu0 0.0
        %630 = vmatprep.subr.mxu0 0.0
        %631 = vmatpush1.msra.mxu0 0.0
        %632 = vmatprep.subr.mxu0 0.0
        %633 = vmatpush1.msra.mxu0 0.0
        %634 = vmatprep.subr.mxu0 0.0
        %635 = vmatpush1.msra.mxu0 0.0
        %636 = vmatprep.subr.mxu0 0.0
        %637 = vmatpush1.msra.mxu0 0.0
        %638 = vmatprep.subr.mxu0 0.0
        %639 = vmatpush1.msra.mxu0 0.0
        %640 = vmatprep.subr.mxu0 0.0
        %641 = vmatpush1.msra.mxu0 %v605
        %642 = vmatprep.subr.mxu0 0.0
        %643 = vmatpush2.msra.mxu0 0.0
        %644 = vmatprep.subr.mxu0 0.0
        %645 = vmatpush2.msra.mxu0 0.0
        %646 = vmatprep.subr.mxu0 0.0
        %647 = vmatpush2.msra.mxu0 0.0
        %648 = vmatprep.subr.mxu0 0.0
        %649 = vmatpush2.msra.mxu0 0.0
        %650 = vmatprep.subr.mxu0 0.0
        %651 = vmatpush2.msra.mxu0 0.0
        %652 = vmatprep.subr.mxu0 0.0
        %653 = vmatpush2.msra.mxu0 0.0
        %654 = vmatprep.subr.mxu0 0.0
        %655 = vmatpush2.msra.mxu0 0.0
        %656 = vmatprep.subr.mxu0 0.0
        %657 = vmatpush2.msra.mxu0 0.0
        %658 = vmatprep.subr.mxu0 0.0
        %659 = vmatpush2.msra.mxu0 0.0
        %660 = vmatprep.subr.mxu0 0.0
        %661 = vmatpush2.msra.mxu0 0.0
        %662 = vmatprep.subr.mxu0 0.0
        %663 = vmatpush2.msra.mxu0 0.0
        %664 = vmatprep.subr.mxu0 0.0
        %665 = vmatpush2.msra.mxu0 0.0
        %666 = vmatprep.subr.mxu0 0.0
        %667 = vmatpush2.msra.mxu0 0.0
        %668 = vmatprep.subr.mxu0 0.0
        %669 = vmatpush2.msra.mxu0 0.0
        %670 = vmatprep.subr.mxu0 0.0
        %671 = vmatpush2.msra.mxu0 0.0
        %672 = vmatprep.subr.mxu0 0.0
        %673 = vmatpush2.msra.mxu0 0.0
        %674 = vmatprep.mubr.f32.mxu0 0.0
        %675 = vmatmul.mubr.f32.gmra.mxu0 %v608
        %v676 = vpop.f32.mrf.mxu0
        %v677 = vadd.f32 0.0, %v676
        %v678 = vpop.f32.mrf.mxu0
        %679 = vdwg.mxu0
        %s680 = scalar_lea.vmem %s278, 16 [#allocation6]
        %681 = vst.msk [vmem:[%s680] sm:$0xff] %vm374, %v677
        %s682 = scalar_lea.vmem [#allocation4], 24
        %v683 = vld [vmem:[%s682] sm:$0xff]
        %684 = vrot.lane.b32.xlu0 %v447, 104
        %v685 = vpop.permute.xlu0 %684
        %v686 = vsel %vm451, %v685, 0
        %688 = vmatprep.subr.mxu0 0.0
        %689 = vmatpush1.msra.mxu0 0.0
        %690 = vmatprep.subr.mxu0 0.0
        %691 = vmatpush1.msra.mxu0 0.0
        %692 = vmatprep.subr.mxu0 0.0
        %693 = vmatpush1.msra.mxu0 0.0
        %694 = vmatprep.subr.mxu0 0.0
        %695 = vmatpush1.msra.mxu0 0.0
        %696 = vmatprep.subr.mxu0 0.0
        %697 = vmatpush1.msra.mxu0 0.0
        %698 = vmatprep.subr.mxu0 0.0
        %699 = vmatpush1.msra.mxu0 0.0
        %700 = vmatprep.subr.mxu0 0.0
        %701 = vmatpush1.msra.mxu0 0.0
        %702 = vmatprep.subr.mxu0 0.0
        %703 = vmatpush1.msra.mxu0 0.0
        %704 = vmatprep.subr.mxu0 0.0
        %705 = vmatpush1.msra.mxu0 0.0
        %706 = vmatprep.subr.mxu0 0.0
        %707 = vmatpush1.msra.mxu0 0.0
        %708 = vmatprep.subr.mxu0 0.0
        %709 = vmatpush1.msra.mxu0 0.0
        %710 = vmatprep.subr.mxu0 0.0
        %711 = vmatpush1.msra.mxu0 0.0
        %712 = vmatprep.subr.mxu0 0.0
        %713 = vmatpush1.msra.mxu0 0.0
        %714 = vmatprep.subr.mxu0 0.0
        %715 = vmatpush1.msra.mxu0 0.0
        %716 = vmatprep.subr.mxu0 0.0
        %717 = vmatpush1.msra.mxu0 0.0
        %718 = vmatprep.subr.mxu0 0.0
        %719 = vmatpush1.msra.mxu0 %v683
        %720 = vmatprep.subr.mxu0 0.0
        %721 = vmatpush2.msra.mxu0 0.0
        %722 = vmatprep.subr.mxu0 0.0
        %723 = vmatpush2.msra.mxu0 0.0
        %724 = vmatprep.subr.mxu0 0.0
        %725 = vmatpush2.msra.mxu0 0.0
        %726 = vmatprep.subr.mxu0 0.0
        %727 = vmatpush2.msra.mxu0 0.0
        %728 = vmatprep.subr.mxu0 0.0
        %729 = vmatpush2.msra.mxu0 0.0
        %730 = vmatprep.subr.mxu0 0.0
        %731 = vmatpush2.msra.mxu0 0.0
        %732 = vmatprep.subr.mxu0 0.0
        %733 = vmatpush2.msra.mxu0 0.0
        %734 = vmatprep.subr.mxu0 0.0
        %735 = vmatpush2.msra.mxu0 0.0
        %736 = vmatprep.subr.mxu0 0.0
        %737 = vmatpush2.msra.mxu0 0.0
        %738 = vmatprep.subr.mxu0 0.0
        %739 = vmatpush2.msra.mxu0 0.0
        %740 = vmatprep.subr.mxu0 0.0
        %741 = vmatpush2.msra.mxu0 0.0
        %742 = vmatprep.subr.mxu0 0.0
        %743 = vmatpush2.msra.mxu0 0.0
        %744 = vmatprep.subr.mxu0 0.0
        %745 = vmatpush2.msra.mxu0 0.0
        %746 = vmatprep.subr.mxu0 0.0
        %747 = vmatpush2.msra.mxu0 0.0
        %748 = vmatprep.subr.mxu0 0.0
        %749 = vmatpush2.msra.mxu0 0.0
        %750 = vmatprep.subr.mxu0 0.0
        %751 = vmatpush2.msra.mxu0 0.0
        %752 = vmatprep.mubr.f32.mxu0 0.0
        %753 = vmatmul.mubr.f32.gmra.mxu0 %v686
        %v754 = vpop.f32.mrf.mxu0
        %v755 = vadd.f32 0.0, %v754
        %v756 = vpop.f32.mrf.mxu0
        %757 = vdwg.mxu0
        %s758 = scalar_lea.vmem %s278, 24 [#allocation6]
        %759 = vst.msk [vmem:[%s758] sm:$0xff] %vm374, %v755
        %p760 = scmp.lt.s32.totalorder %s23, 1
        %s761 = scalar_select %p760, %s23, 1
        %p762 = scmp.lt.s32.totalorder %s24, 2
        %s763 = scalar_select %p762, %s24, 2
        %s764 = smul.addr %s761, 3
        %s765 = sadd.s32 %s763, %s764
        %s766 = smul.addr %s765, 8
        %s767 = scalar_lea.vmem %s4, %s766
        %s768 = sand.u32 %s160, 1
        %s769 = sand.u32 %s160, 1
        %s770 = smul.addr %s769, 32
        %s771 = scalar_lea.vmem [#allocation6], %s770
        // Predicated region
        $region45: #{tpu_custom_call.1} parent=35 // pred_check
          %p772 = pneg %p142
        $region46: #{tpu_custom_call.1} parent=35 // pred_check_branch
          %774 = sbr.rel (%p772) target = $region48
        $region47: #{tpu_custom_call.1} parent=35 // pred_region
          _
        $region48: #{tpu_custom_call.1} parent=35 // pred_fallthru
          _
        // Predicated region
        $region49: #{tpu_custom_call.1} parent=35 // pred_check
          %p775 = pneg %p170
        $region50: #{tpu_custom_call.1} parent=35 // pred_check_branch
          %777 = sbr.rel (%p775) target = $region52
        $region51: #{tpu_custom_call.1} parent=35 // pred_region
          %s778 = smul.addr %s23, 12
          %s779 = sadd.s32 %s24, %s778
          %s780 = smul.addr %s779, 8
          %s781 = scalar_lea.vmem %s5, %s780
          // Predicated region
          $region53: #{tpu_custom_call.1} parent=51 // pred_check
            _
          $region54: #{tpu_custom_call.1} parent=51 // pred_check_branch
            %783 = sbr.rel (0) target = $region56
          $region55: #{tpu_custom_call.1} parent=51 // pred_region
            // Predicated region
            $region57: #{tpu_custom_call.1} parent=55 // pred_check
              _
            $region58: #{tpu_custom_call.1} parent=55 // pred_check_branch
              %785 = sbr.rel (0) target = $region60
            $region59: #{tpu_custom_call.1} parent=55 // pred_region
              // Predicated region
              $region72: #{tpu_custom_call.1} parent=59 // pred_check
                _
              $region73: #{tpu_custom_call.1} parent=59 // pred_check_branch
                %807 = sbr.rel (0) target = $region75
              $region74: #{tpu_custom_call.1} parent=59 // pred_region
                loop: start=0, step=1, limit=1
                $region76: #{tpu_custom_call.1} parent=74 // loop_pre_header
                  _
                $region77: #{tpu_custom_call.1} parent=74 // loop_header
                  %s809 = sphi 0, %s813
                  %p810 = scmp.ge.s32.totalorder %s809, 1
                  %s814 = sphi %s771, %s771
                  %s815 = sphi %s781, %s781
                $region78: #{tpu_custom_call.1} parent=74 // loop_header_branch
                  %812 = sbr.rel (%p810) target = $region82
                $region79: #{tpu_custom_call.1} parent=74 // loop_body
                  %v816 = vld [vmem:[%s814] sm:$0xff]
                  %817 = vst [vmem:[%s815] sm:$0xff] %v816
                  %v818 = vld [vmem:[%s814 + $0x8] sm:$0xff]
                  %819 = vst [vmem:[%s815 + $0x18] sm:$0xff] %v818
                  %v820 = vld [vmem:[%s814 + $0x10] sm:$0xff]
                  %821 = vst [vmem:[%s815 + $0x30] sm:$0xff] %v820
                  %v822 = vld [vmem:[%s814 + $0x18] sm:$0xff]
                  %823 = vst [vmem:[%s815 + $0x48] sm:$0xff] %v822
                $region80: #{tpu_custom_call.1} parent=74 // loop_footer
                  %s813 = sadd.s32 1, %s809
                $region81: #{tpu_custom_call.1} parent=74 // loop_footer_branch
                  %808 = sbr.rel target = $region77
                $region82: #{tpu_custom_call.1} parent=74 // loop_exit
                  _
              $region75: #{tpu_custom_call.1} parent=59 // pred_fallthru
                _
              // Predicated region
              $region83: #{tpu_custom_call.1} parent=59 // pred_check
                _
              $region84: #{tpu_custom_call.1} parent=59 // pred_check_branch
                %825 = sbr.rel target = $region86
              $region85: #{tpu_custom_call.1} parent=59 // pred_region
                _
              $region86: #{tpu_custom_call.1} parent=59 // pred_fallthru
                _
            $region60: #{tpu_custom_call.1} parent=55 // pred_fallthru
              _
            // Predicated region
            $region61: #{tpu_custom_call.1} parent=55 // pred_check
              _
            $region62: #{tpu_custom_call.1} parent=55 // pred_check_branch
              %787 = sbr.rel target = $region64
            $region63: #{tpu_custom_call.1} parent=55 // pred_region
              %s789 = ssub.s32 256, 1
              loop: start=0, step=1, limit=1
              $region65: #{tpu_custom_call.1} parent=63 // loop_pre_header
                _
              $region66: #{tpu_custom_call.1} parent=63 // loop_header
                %s791 = sphi 0, %s795
                %p792 = scmp.ge.s32.totalorder %s791, 1
                %s796 = sphi %s771, %s771
                %s797 = sphi %s781, %s781
              $region67: #{tpu_custom_call.1} parent=63 // loop_header_branch
                %794 = sbr.rel (%p792) target = $region71
              $region68: #{tpu_custom_call.1} parent=63 // loop_body
                %v798 = vld [vmem:[%s796] sm:%s789]
                %799 = vst [vmem:[%s797] sm:%s789] %v798
                %v800 = vld [vmem:[%s796 + $0x8] sm:%s789]
                %801 = vst [vmem:[%s797 + $0x18] sm:%s789] %v800
                %v802 = vld [vmem:[%s796 + $0x10] sm:%s789]
                %803 = vst [vmem:[%s797 + $0x30] sm:%s789] %v802
                %v804 = vld [vmem:[%s796 + $0x18] sm:%s789]
                %805 = vst [vmem:[%s797 + $0x48] sm:%s789] %v804
              $region69: #{tpu_custom_call.1} parent=63 // loop_footer
                %s795 = sadd.s32 1, %s791
              $region70: #{tpu_custom_call.1} parent=63 // loop_footer_branch
                %790 = sbr.rel target = $region66
              $region71: #{tpu_custom_call.1} parent=63 // loop_exit
                _
            $region64: #{tpu_custom_call.1} parent=55 // pred_fallthru
              _
          $region56: #{tpu_custom_call.1} parent=51 // pred_fallthru
            _
          %826 = vnop
        $region52: #{tpu_custom_call.1} parent=35 // pred_fallthru
          _
      $region36: #{tpu_custom_call.1} parent=5 // pred_fallthru
        _
      %p827 = scmp.le.s32.totalorder 2, %s14
      // Predicated region
      $region87: #{tpu_custom_call.1} parent=5 // pred_check
        %p828 = pneg %p827
      $region88: #{tpu_custom_call.1} parent=5 // pred_check_branch
        %830 = sbr.rel (%p828) target = $region90
      $region89: #{tpu_custom_call.1} parent=5 // pred_region
        %s831 = ssub.s32 %s14, 2
        // Predicated region
        $region91: #{tpu_custom_call.1} parent=89 // pred_check
          %p832 = pneg %p148
        $region92: #{tpu_custom_call.1} parent=89 // pred_check_branch
          %834 = sbr.rel (%p832) target = $region94
        $region93: #{tpu_custom_call.1} parent=89 // pred_region
          %p835 = scmp.lt.s32.totalorder %s25, 1
          %s836 = scalar_select %p835, %s25, 1
          %p837 = scmp.lt.s32.totalorder %s26, 2
          %s838 = scalar_select %p837, %s26, 2
          %s839 = smul.addr %s836, 3
          %s840 = sadd.s32 %s838, %s839
          %s841 = smul.addr %s840, 8
          %s842 = scalar_lea.vmem %s4, %s841
        $region94: #{tpu_custom_call.1} parent=89 // pred_fallthru
          _
        // Predicated region
        $region95: #{tpu_custom_call.1} parent=89 // pred_check
          %p843 = pneg %p176
        $region96: #{tpu_custom_call.1} parent=89 // pred_check_branch
          %845 = sbr.rel (%p843) target = $region98
        $region97: #{tpu_custom_call.1} parent=89 // pred_region
          %s846 = sand.u32 %s161, 1
          %s847 = sand.u32 %s161, 1
          %s848 = smul.addr %s847, 32
          %s849 = scalar_lea.vmem [#allocation6], %s848
        $region98: #{tpu_custom_call.1} parent=89 // pred_fallthru
          _
      $region90: #{tpu_custom_call.1} parent=5 // pred_fallthru
        _
    $region6: #{tpu_custom_call.1} parent=1 // loop_footer
      %s18 = sadd.s32 1, %s14
    $region7: #{tpu_custom_call.1} parent=1 // loop_footer_branch
      %13 = sbr.rel target = $region3
    $region8: #{tpu_custom_call.1} parent=1 // loop_exit
      _
    %850 = vsyncpa [#allocation3], 1
    %s851 = scalar_lea.sflag [#allocation3], 1
    %852 = vsyncpa %s851, 1
    %853 = vsyncpa [#allocation5], 1

// kernel: tpu_custom_call.1
$region0: #{tpu_custom_call.1}
  #allocation0 [shape = 'u32[]', space=smem, size = 0x4, offset = 0x4, fixed_abs, tag = 'smem constant byte address 0x4 - core index']
  #allocation1 [shape = 'u32[144,128]{1,0:T(1,128)}', space=vmem, size = 0x12000, scoped, tag = 'internal scratch']
  %s0 = inlined_call_operand.vmem [shape: f32[2,24,32], index: 0, kind: input, shape index: {}]
  %s1 = inlined_call_operand.hbm [shape: f32[32,32], index: 1, kind: input, shape index: {}]
  %s2 = inlined_call_operand.vmem [shape: f32[32,16], index: 2, kind: input, shape index: {}]
  %s3 = inlined_call_operand.hbm [shape: f32[4,8,16], index: 3, kind: input, shape index: {}]
  %s4 = inlined_call_operand.vmem [shape: f32[2,24,16], index: 4, kind: output, shape index: {0}]
  %s5 = inlined_call_operand.vmem [shape: f32[2,4,24,16], index: 5, kind: output, shape index: {1}]
  %6 = xla_tuple %s4, %s5
  %s7 = sld [smem:[#allocation0]]
  $region99: #{tpu_custom_call.1} parent=0
    _
  %s9 = ssub.s32 1, %s7
  %s10 = scalar_select 0, %s9, %s7
  $region1: #{tpu_custom_call.1} parent=0
    #allocation2 [shape = 'u8[16384]{0}', space=vmem, size = 0x4000, scoped, tag = 'input window, operand 1, single buffered']
    #allocation3 [shape = 's32[2]{0}', space=sflag, size = 0x8, scoped, tag = 'scoped memory for tpu_custom_call.1']
    #allocation4 [shape = 'u8[16384]{0}', space=vmem, size = 0x4000, scoped, tag = 'input window, operand 3, single buffered']
    #allocation5 [shape = 's32[1]{0}', space=sflag, size = 0x4, scoped, tag = 'scoped memory for tpu_custom_call.1']
    #allocation6 [shape = 'u8[32768]{0}', space=vmem, size = 0x8000, scoped, tag = 'output window, operand 1']
    %11 = vsyncpa [#allocation3], 0
    %12 = vsyncpa [#allocation5], 0
    loop: start=0, step=1, limit=8
    $region2: #{tpu_custom_call.1} parent=1 // loop_pre_header
      _
    $region3: #{tpu_custom_call.1} parent=1 // loop_header
      %s14 = sphi 0, %s18
      %p15 = scmp.ge.s32.totalorder %s14, 8
      %s21 = sphi 0, %s33
      %s22 = sphi 0, %s29
      %s23 = sphi 0, %s21
      %s24 = sphi 0, %s22
      %s25 = sphi 0, %s23
      %s26 = sphi 0, %s24
      %s38 = sphi 0, %s40
      %s41 = sphi 0, %s38
      %s42 = sphi 0, %s41
      %s58 = sphi 0, %s42
      %s62 = sphi 0, %s62
      %s64 = sphi 0, %s62
      %s65 = sphi 0, %s64
      %s79 = sphi 0, %s65
      %s83 = sphi 0, %s83
      %s85 = sphi 0, %s83
      %s86 = sphi 0, %s85
      %s100 = sphi 0, %s86
      %s104 = sphi 0, %s104
      %s106 = sphi 0, %s104
      %s107 = sphi 0, %s106
      %s121 = sphi 0, %s107
      %s129 = sphi 0, %s131
      %s132 = sphi 0, %s129
      %s133 = sphi 0, %s132
      %s149 = sphi 0, %s133
      %s157 = sphi 0, %s159
      %s160 = sphi 0, %s157
      %s161 = sphi 0, %s160
      %s177 = sphi 0, %s161
    $region4: #{tpu_custom_call.1} parent=1 // loop_header_branch
      %17 = sbr.rel (%p15) target = $region8
    $region5: #{tpu_custom_call.1} parent=1 // loop_body
      %s19 = ssub.s32 %s14, 1
      %s20 = ssub.s32 %s14, 2
      %s27 = sadd.s32 1, %s22
      %p28 = scmp.ge.s32.totalorder %s27, 3
      %s29 = scalar_select %p28, 0, %s27
      %s30 = sadd.s32 1, %s21
      %s31 = scalar_select %p28, %s30, %s21
      %p32 = scmp.ge.s32.totalorder %s31, 2
      %s33 = scalar_select %p32, 0, %s31
      %s34 = ssub.s32 %s21, %s33
      %s35 = ssub.s32 %s22, %s29
      %s36 = sor.u32 %s34, %s35
      %p37 = scmp.eq.s32.totalorder %s36, 0
      %s39 = sadd.s32 %s38, 1
      %s40 = scalar_select %p37, %s38, %s39
      %p43 = pneg %p37
      %p44 = scmp.eq.s32.totalorder %s14, 5
      %p45 = por %p43, %p44
      %p46 = scmp.ne.s32.totalorder %s38, %s41
      %p47 = scmp.eq.s32.totalorder %s14, 0
      %p48 = por %p46, %p47
      %p49 = scmp.ne.s32.totalorder %s38, %s41
      %p50 = scmp.eq.s32.totalorder %s19, 5
      %p51 = por %p49, %p50
      %p52 = scmp.ne.s32.totalorder %s41, %s42
      %p53 = scmp.eq.s32.totalorder %s19, 0
      %p54 = por %p52, %p53
      %p55 = scmp.ne.s32.totalorder %s41, %s42
      %p56 = scmp.eq.s32.totalorder %s20, 5
      %p57 = por %p55, %p56
      %p59 = scmp.ne.s32.totalorder %s42, %s58
      %p60 = scmp.eq.s32.totalorder %s20, 0
      %p61 = por %p59, %p60
      %s63 = sadd.s32 %s62, 1
      %p66 = scmp.eq.s32.totalorder %s14, 5
      %p67 = scmp.ne.s32.totalorder %s62, %s64
      %p68 = scmp.eq.s32.totalorder %s14, 0
      %p69 = por %p67, %p68
      %p70 = scmp.ne.s32.totalorder %s62, %s64
      %p71 = scmp.eq.s32.totalorder %s19, 5
      %p72 = por %p70, %p71
      %p73 = scmp.ne.s32.totalorder %s64, %s65
      %p74 = scmp.eq.s32.totalorder %s19, 0
      %p75 = por %p73, %p74
      %p76 = scmp.ne.s32.totalorder %s64, %s65
      %p77 = scmp.eq.s32.totalorder %s20, 5
      %p78 = por %p76, %p77
      %p80 = scmp.ne.s32.totalorder %s65, %s79
      %p81 = scmp.eq.s32.totalorder %s20, 0
      %p82 = por %p80, %p81
      %s84 = sadd.s32 %s83, 1
      %p87 = scmp.eq.s32.totalorder %s14, 5
      %p88 = scmp.ne.s32.totalorder %s83, %s85
      %p89 = scmp.eq.s32.totalorder %s14, 0
      %p90 = por %p88, %p89
      %p91 = scmp.ne.s32.totalorder %s83, %s85
      %p92 = scmp.eq.s32.totalorder %s19, 5
      %p93 = por %p91, %p92
      %p94 = scmp.ne.s32.totalorder %s85, %s86
      %p95 = scmp.eq.s32.totalorder %s19, 0
      %p96 = por %p94, %p95
      %p97 = scmp.ne.s32.totalorder %s85, %s86
      %p98 = scmp.eq.s32.totalorder %s20, 5
      %p99 = por %p97, %p98
      %p101 = scmp.ne.s32.totalorder %s86, %s100
      %p102 = scmp.eq.s32.totalorder %s20, 0
      %p103 = por %p101, %p102
      %s105 = sadd.s32 %s104, 1
      %p108 = scmp.eq.s32.totalorder %s14, 5
      %p109 = scmp.ne.s32.totalorder %s104, %s106
      %p110 = scmp.eq.s32.totalorder %s14, 0
      %p111 = por %p109, %p110
      %p112 = scmp.ne.s32.totalorder %s104, %s106
      %p113 = scmp.eq.s32.totalorder %s19, 5
      %p114 = por %p112, %p113
      %p115 = scmp.ne.s32.totalorder %s106, %s107
      %p116 = scmp.eq.s32.totalorder %s19, 0
      %p117 = por %p115, %p116
      %p118 = scmp.ne.s32.totalorder %s106, %s107
      %p119 = scmp.eq.s32.totalorder %s20, 5
      %p120 = por %p118, %p119
      %p122 = scmp.ne.s32.totalorder %s107, %s121
      %p123 = scmp.eq.s32.totalorder %s20, 0
      %p124 = por %p122, %p123
      %s125 = ssub.s32 %s21, %s33
      %s126 = ssub.s32 %s22, %s29
      %s127 = sor.u32 %s125, %s126
      %p128 = scmp.eq.s32.totalorder %s127, 0
      %s130 = sadd.s32 %s129, 1
      %s131 = scalar_select %p128, %s129, %s130
      %p134 = pneg %p128
      %p135 = scmp.eq.s32.totalorder %s14, 5
      %p136 = por %p134, %p135
      %p137 = scmp.ne.s32.totalorder %s129, %s132
      %p138 = scmp.eq.s32.totalorder %s14, 0
      %p139 = por %p137, %p138
      %p140 = scmp.ne.s32.totalorder %s129, %s132
      %p141 = scmp.eq.s32.totalorder %s19, 5
      %p142 = por %p140, %p141
      %p143 = scmp.ne.s32.totalorder %s132, %s133
      %p144 = scmp.eq.s32.totalorder %s19, 0
      %p145 = por %p143, %p144
      %p146 = scmp.ne.s32.totalorder %s132, %s133
      %p147 = scmp.eq.s32.totalorder %s20, 5
      %p148 = por %p146, %p147
      %p150 = scmp.ne.s32.totalorder %s133, %s149
      %p151 = scmp.eq.s32.totalorder %s20, 0
      %p152 = por %p150, %p151
      %s153 = ssub.s32 %s21, %s33
      %s154 = ssub.s32 %s22, %s29
      %s155 = sor.u32 %s153, %s154
      %p156 = scmp.eq.s32.totalorder %s155, 0
      %s158 = sadd.s32 %s157, 1
      %s159 = scalar_select %p156, %s157, %s158
      %p162 = pneg %p156
      %p163 = scmp.eq.s32.totalorder %s14, 5
      %p164 = por %p162, %p163
      %p165 = scmp.ne.s32.totalorder %s157, %s160
      %p166 = scmp.eq.s32.totalorder %s14, 0
      %p167 = por %p165, %p166
      %p168 = scmp.ne.s32.totalorder %s157, %s160
      %p169 = scmp.eq.s32.totalorder %s19, 5
      %p170 = por %p168, %p169
      %p171 = scmp.ne.s32.totalorder %s160, %s161
      %p172 = scmp.eq.s32.totalorder %s19, 0
      %p173 = por %p171, %p172
      %p174 = scmp.ne.s32.totalorder %s160, %s161
      %p175 = scmp.eq.s32.totalorder %s20, 5
      %p176 = por %p174, %p175
      %p178 = scmp.ne.s32.totalorder %s161, %s177
      %p179 = scmp.eq.s32.totalorder %s20, 0
      %p180 = por %p178, %p179
      %p181 = scmp.le.s32.totalorder 1, %s14
      %p182 = scmp.lt.s32.totalorder %s14, 7
      %p183 = pnand %p181, %p182
      %p184 = pneg %p183
      // Predicated region
      $region9: #{tpu_custom_call.1} parent=5 // pred_check
        _
      $region10: #{tpu_custom_call.1} parent=5 // pred_check_branch
        %186 = sbr.rel (%p183) target = $region12
      $region11: #{tpu_custom_call.1} parent=5 // pred_region
        %s187 = ssub.s32 %s14, 1
        // Predicated region
        $region13: #{tpu_custom_call.1} parent=11 // pred_check
          %p188 = pneg %p75
        $region14: #{tpu_custom_call.1} parent=11 // pred_check_branch
          %190 = sbr.rel (%p188) target = $region16
        $region15: #{tpu_custom_call.1} parent=11 // pred_region
          %s192 = ssub.s32 512, 512
          %193 = vsyncadd [#allocation3], %s192
          %s194 = sshll.u32 [#allocation2], 4
          %s195 = int_to_ptr.vmem [resolvable:$true] %s194
          %200 = dma.hbm_to_vmem [thread:$0]  %s1, 512, %s195, [#allocation3], 128, 128, 8
        $region16: #{tpu_custom_call.1} parent=11 // pred_fallthru
          _
        // Predicated region
        $region17: #{tpu_custom_call.1} parent=11 // pred_check
          %p201 = pneg %p96
        $region18: #{tpu_custom_call.1} parent=11 // pred_check_branch
          %203 = sbr.rel (%p201) target = $region20
        $region19: #{tpu_custom_call.1} parent=11 // pred_region
          _
        $region20: #{tpu_custom_call.1} parent=11 // pred_fallthru
          _
        // Predicated region
        $region21: #{tpu_custom_call.1} parent=11 // pred_check
          %p204 = pneg %p117
        $region22: #{tpu_custom_call.1} parent=11 // pred_check_branch
          %206 = sbr.rel (%p204) target = $region24
        $region23: #{tpu_custom_call.1} parent=11 // pred_region
          %s208 = ssub.s32 512, 512
          %209 = vsyncadd [#allocation5], %s208
          %s210 = sshll.u32 [#allocation4], 4
          %s211 = int_to_ptr.vmem [resolvable:$true] %s210
          %216 = dma.hbm_to_vmem [thread:$0]  %s3, 512, %s211, [#allocation5], 128, 128, 8
        $region24: #{tpu_custom_call.1} parent=11 // pred_fallthru
          _
      $region12: #{tpu_custom_call.1} parent=5 // pred_fallthru
        _
      %p217 = scmp.lt.s32.totalorder %s14, 6
      // Predicated region
      $region25: #{tpu_custom_call.1} parent=5 // pred_check
        %p218 = pneg %p217
      $region26: #{tpu_custom_call.1} parent=5 // pred_check_branch
        %220 = sbr.rel (%p218) target = $region28
      $region27: #{tpu_custom_call.1} parent=5 // pred_region
        // Predicated region
        $region29: #{tpu_custom_call.1} parent=27 // pred_check
          %p221 = pneg %p48
        $region30: #{tpu_custom_call.1} parent=27 // pred_check_branch
          %223 = sbr.rel (%p221) target = $region32
        $region31: #{tpu_custom_call.1} parent=27 // pred_region
          %p224 = scmp.lt.s32.totalorder %s21, 1
          %s225 = scalar_select %p224, %s21, 1
          %p226 = scmp.lt.s32.totalorder %s22, 2
          %s227 = scalar_select %p226, %s22, 2
          %s228 = smul.addr %s225, 3
          %s229 = sadd.s32 %s227, %s228
          %s230 = smul.addr %s229, 8
          %s231 = scalar_lea.vmem %s0, %s230
        $region32: #{tpu_custom_call.1} parent=27 // pred_fallthru
          _
      $region28: #{tpu_custom_call.1} parent=5 // pred_fallthru
        _
      %p232 = scmp.le.s32.totalorder 1, %s14
      %p233 = scmp.lt.s32.totalorder %s14, 7
      %p234 = pnand %p232, %p233
      %p235 = pneg %p234
      // Predicated region
      $region33: #{tpu_custom_call.1} parent=5 // pred_check
        _
      $region34: #{tpu_custom_call.1} parent=5 // pred_check_branch
        %237 = sbr.rel (%p234) target = $region36
      $region35: #{tpu_custom_call.1} parent=5 // pred_region
        %s238 = ssub.s32 %s14, 1
        // Predicated region
        $region37: #{tpu_custom_call.1} parent=35 // pred_check
          %p239 = pneg %p75
        $region38: #{tpu_custom_call.1} parent=35 // pred_check_branch
          %241 = sbr.rel (%p239) target = $region40
        $region39: #{tpu_custom_call.1} parent=35 // pred_region
          %242 = dma.done [#allocation3], 512
        $region40: #{tpu_custom_call.1} parent=35 // pred_fallthru
          _
        // Predicated region
        $region41: #{tpu_custom_call.1} parent=35 // pred_check
          %p243 = pneg %p117
        $region42: #{tpu_custom_call.1} parent=35 // pred_check_branch
          %245 = sbr.rel (%p243) target = $region44
        $region43: #{tpu_custom_call.1} parent=35 // pred_region
          %246 = dma.done [#allocation5], 512
        $region44: #{tpu_custom_call.1} parent=35 // pred_fallthru
          _
        %p247 = scmp.lt.s32.totalorder %s23, 1
        %s248 = scalar_select %p247, %s23, 1
        %p249 = scmp.lt.s32.totalorder %s24, 2
        %s250 = scalar_select %p249, %s24, 2
        %s251 = smul.addr %s248, 3
        %s252 = sadd.s32 %s250, %s251
        %s253 = smul.addr %s252, 8
        %s254 = scalar_lea.vmem %s0, %s253
        %p255 = pneg %p54
        %p256 = pneg %p51
        %p257 = pneg %p75
        %p258 = pneg %p72
        %p259 = pneg %p96
        %p260 = pneg %p93
        %p261 = pneg %p117
        %p262 = pneg %p114
        %p263 = pneg %p145
        %p264 = pneg %p142
        %p265 = scmp.lt.s32.totalorder %s23, 1
        %s266 = scalar_select %p265, %s23, 1
        %p267 = scmp.lt.s32.totalorder %s24, 2
        %s268 = scalar_select %p267, %s24, 2
        %s269 = smul.addr %s266, 3
        %s270 = sadd.s32 %s268, %s269
        %s271 = smul.addr %s270, 8
        %s272 = scalar_lea.vmem %s4, %s271
        %p273 = pneg %p173
        %p274 = pneg %p170
        %s275 = sand.u32 %s160, 1
        %s276 = sand.u32 %s160, 1
        %s277 = smul.addr %s276, 32
        %s278 = scalar_lea.vmem [#allocation6], %s277
        %p279 = scmp.lt.s32.totalorder %s23, 1
        %s280 = scalar_select %p279, %s23, 1
        %p281 = scmp.lt.s32.totalorder %s24, 2
        %s282 = scalar_select %p281, %s24, 2
        %s283 = smul.addr %s280, 3
        %s284 = sadd.s32 %s282, %s283
        %s285 = smul.addr %s284, 8
        %s286 = scalar_lea.vmem %s0, %s285
        %p287 = scmp.lt.s32.totalorder %s23, 1
        %s288 = scalar_select %p287, %s23, 1
        %p289 = scmp.lt.s32.totalorder %s24, 2
        %s290 = scalar_select %p289, %s24, 2
        %s291 = smul.addr %s288, 3
        %s292 = sadd.s32 %s290, %s291
        %s293 = smul.addr %s292, 8
        %s294 = scalar_lea.vmem %s4, %s293
        %v295 = vld [vmem:[%s286] sm:$0xff]
        %v296 = vld [vmem:[%s2] sm:$0xff]
        %v297 = vld [vmem:[%s2 + $0x8] sm:$0xff]
        %v298 = vld [vmem:[%s2 + $0x10] sm:$0xff]
        %v299 = vld [vmem:[%s2 + $0x18] sm:$0xff]
        %vm300 = vcmask 261120
        %v302 = vsel %vm300, %v295, 0
        %304 = vmatprep.subr.mxu0 0.0
        %305 = vmatpush1.msra.mxu0 0.0
        %306 = vmatprep.subr.mxu0 0.0
        %307 = vmatpush1.msra.mxu0 0.0
        %308 = vmatprep.subr.mxu0 0.0
        %309 = vmatpush1.msra.mxu0 0.0
        %310 = vmatprep.subr.mxu0 0.0
        %311 = vmatpush1.msra.mxu0 0.0
        %312 = vmatprep.subr.mxu0 0.0
        %313 = vmatpush1.msra.mxu0 0.0
        %314 = vmatprep.subr.mxu0 0.0
        %315 = vmatpush1.msra.mxu0 0.0
        %316 = vmatprep.subr.mxu0 0.0
        %317 = vmatpush1.msra.mxu0 0.0
        %318 = vmatprep.subr.mxu0 0.0
        %319 = vmatpush1.msra.mxu0 0.0
        %320 = vmatprep.subr.mxu0 0.0
        %321 = vmatpush1.msra.mxu0 0.0
        %322 = vmatprep.subr.mxu0 0.0
        %323 = vmatpush1.msra.mxu0 0.0
        %324 = vmatprep.subr.mxu0 0.0
        %325 = vmatpush1.msra.mxu0 0.0
        %326 = vmatprep.subr.mxu0 0.0
        %327 = vmatpush1.msra.mxu0 0.0
        %328 = vmatprep.subr.mxu0 0.0
        %329 = vmatpush1.msra.mxu0 %v299
        %330 = vmatprep.subr.mxu0 0.0
        %331 = vmatpush1.msra.mxu0 %v298
        %332 = vmatprep.subr.mxu0 0.0
        %333 = vmatpush1.msra.mxu0 %v297
        %334 = vmatprep.subr.mxu0 0.0
        %335 = vmatpush1.msra.mxu0 %v296
        %336 = vmatprep.subr.mxu0 0.0
        %337 = vmatpush2.msra.mxu0 0.0
        %338 = vmatprep.subr.mxu0 0.0
        %339 = vmatpush2.msra.mxu0 0.0
        %340 = vmatprep.subr.mxu0 0.0
        %341 = vmatpush2.msra.mxu0 0.0
        %342 = vmatprep.subr.mxu0 0.0
        %343 = vmatpush2.msra.mxu0 0.0
        %344 = vmatprep.subr.mxu0 0.0
        %345 = vmatpush2.msra.mxu0 0.0
        %346 = vmatprep.subr.mxu0 0.0
        %347 = vmatpush2.msra.mxu0 0.0
        %348 = vmatprep.subr.mxu0 0.0
        %349 = vmatpush2.msra.mxu0 0.0
        %350 = vmatprep.subr.mxu0 0.0
        %351 = vmatpush2.msra.mxu0 0.0
        %352 = vmatprep.subr.mxu0 0.0
        %353 = vmatpush2.msra.mxu0 0.0
        %354 = vmatprep.subr.mxu0 0.0
        %355 = vmatpush2.msra.mxu0 0.0
        %356 = vmatprep.subr.mxu0 0.0
        %357 = vmatpush2.msra.mxu0 0.0
        %358 = vmatprep.subr.mxu0 0.0
        %359 = vmatpush2.msra.mxu0 0.0
        %360 = vmatprep.subr.mxu0 0.0
        %361 = vmatpush2.msra.mxu0 0.0
        %362 = vmatprep.subr.mxu0 0.0
        %363 = vmatpush2.msra.mxu0 0.0
        %364 = vmatprep.subr.mxu0 0.0
        %365 = vmatpush2.msra.mxu0 0.0
        %366 = vmatprep.subr.mxu0 0.0
        %367 = vmatpush2.msra.mxu0 0.0
        %368 = vmatprep.mubr.f32.mxu0 0.0
        %369 = vmatmul.mubr.f32.gmra.mxu0 %v302
        %v370 = vpop.f32.mrf.mxu0
        %v371 = vadd.f32 0.0, %v370
        %v372 = vpop.f32.mrf.mxu0
        %373 = vdwg.mxu0
        %vm374 = vcmask 130048
        %375 = vst.msk [vmem:[%s294] sm:$0xff] %vm374, %v371
        %v376 = vld [vmem:[#allocation2] sm:$0xff]
        %v377 = vld [vmem:[#allocation2 + $0x8] sm:$0xff]
        %v378 = vld [vmem:[#allocation2 + $0x10] sm:$0xff]
        %v379 = vld [vmem:[#allocation2 + $0x18] sm:$0xff]
        %380 = vmatprep.subr.mxu0 0.0
        %381 = vmatpush1.msra.mxu0 0.0
        %382 = vmatprep.subr.mxu0 0.0
        %383 = vmatpush1.msra.mxu0 0.0
        %384 = vmatprep.subr.mxu0 0.0
        %385 = vmatpush1.msra.mxu0 0.0
        %386 = vmatprep.subr.mxu0 0.0
        %387 = vmatpush1.msra.mxu0 0.0
        %388 = vmatprep.subr.mxu0 0.0
        %389 = vmatpush1.msra.mxu0 0.0
        %390 = vmatprep.subr.mxu0 0.0
        %391 = vmatpush1.msra.mxu0 0.0
        %392 = vmatprep.subr.mxu0 0.0
        %393 = vmatpush1.msra.mxu0 0.0
        %394 = vmatprep.subr.mxu0 0.0
        %395 = vmatpush1.msra.mxu0 0.0
        %396 = vmatprep.subr.mxu0 0.0
        %397 = vmatpush1.msra.mxu0 0.0
        %398 = vmatprep.subr.mxu0 0.0
        %399 = vmatpush1.msra.mxu0 0.0
        %400 = vmatprep.subr.mxu0 0.0
        %401 = vmatpush1.msra.mxu0 0.0
        %402 = vmatprep.subr.mxu0 0.0
        %403 = vmatpush1.msra.mxu0 0.0
        %404 = vmatprep.subr.mxu0 0.0
        %405 = vmatpush1.msra.mxu0 %v379
        %406 = vmatprep.subr.mxu0 0.0
        %407 = vmatpush1.msra.mxu0 %v378
        %408 = vmatprep.subr.mxu0 0.0
        %409 = vmatpush1.msra.mxu0 %v377
        %410 = vmatprep.subr.mxu0 0.0
        %411 = vmatpush1.msra.mxu0 %v376
        %412 = vmatprep.subr.mxu0 0.0
        %413 = vmatpush2.msra.mxu0 0.0
        %414 = vmatprep.subr.mxu0 0.0
        %415 = vmatpush2.msra.mxu0 0.0
        %416 = vmatprep.subr.mxu0 0.0
        %417 = vmatpush2.msra.mxu0 0.0
        %418 = vmatprep.subr.mxu0 0.0
        %419 = vmatpush2.msra.mxu0 0.0
        %420 = vmatprep.subr.mxu0 0.0
        %421 = vmatpush2.msra.mxu0 0.0
        %422 = vmatprep.subr.mxu0 0.0
        %423 = vmatpush2.msra.mxu0 0.0
        %424 = vmatprep.subr.mxu0 0.0
        %425 = vmatpush2.msra.mxu0 0.0
        %426 = vmatprep.subr.mxu0 0.0
        %427 = vmatpush2.msra.mxu0 0.0
        %428 = vmatprep.subr.mxu0 0.0
        %429 = vmatpush2.msra.mxu0 0.0
        %430 = vmatprep.subr.mxu0 0.0
        %431 = vmatpush2.msra.mxu0 0.0
        %432 = vmatprep.subr.mxu0 0.0
        %433 = vmatpush2.msra.mxu0 0.0
        %434 = vmatprep.subr.mxu0 0.0
        %435 = vmatpush2.msra.mxu0 0.0
        %436 = vmatprep.subr.mxu0 0.0
        %437 = vmatpush2.msra.mxu0 0.0
        %438 = vmatprep.subr.mxu0 0.0
        %439 = vmatpush2.msra.mxu0 0.0
        %440 = vmatprep.subr.mxu0 0.0
        %441 = vmatpush2.msra.mxu0 0.0
        %442 = vmatprep.subr.mxu0 0.0
        %443 = vmatpush2.msra.mxu0 0.0
        %444 = vmatprep.mubr.f32.mxu0 0.0
        %445 = vmatmul.mubr.f32.gmra.mxu0 %v302
        %v446 = vpop.f32.mrf.mxu0
        %v447 = vadd.f32 0.0, %v446
        %v448 = vpop.f32.mrf.mxu0
        %449 = vdwg.mxu0
        %v450 = vld [vmem:[#allocation4] sm:$0xff]
        %vm451 = vcmask 64512
        %v453 = vsel %vm451, %v447, 0
        %455 = vmatprep.subr.mxu0 0.0
        %456 = vmatpush1.msra.mxu0 0.0
        %457 = vmatprep.subr.mxu0 0.0
        %458 = vmatpush1.msra.mxu0 0.0
        %459 = vmatprep.subr.mxu0 0.0
        %460 = vmatpush1.msra.mxu0 0.0
        %461 = vmatprep.subr.mxu0 0.0
        %462 = vmatpush1.msra.mxu0 0.0
        %463 = vmatprep.subr.mxu0 0.0
        %464 = vmatpush1.msra.mxu0 0.0
        %465 = vmatprep.subr.mxu0 0.0
        %466 = vmatpush1.msra.mxu0 0.0
        %467 = vmatprep.subr.mxu0 0.0
        %468 = vmatpush1.msra.mxu0 0.0
        %469 = vmatprep.subr.mxu0 0.0
        %470 = vmatpush1.msra.mxu0 0.0
        %471 = vmatprep.subr.mxu0 0.0
        %472 = vmatpush1.msra.mxu0 0.0
        %473 = vmatprep.subr.mxu0 0.0
        %474 = vmatpush1.msra.mxu0 0.0
        %475 = vmatprep.subr.mxu0 0.0
        %476 = vmatpush1.msra.mxu0 0.0
        %477 = vmatprep.subr.mxu0 0.0
        %478 = vmatpush1.msra.mxu0 0.0
        %479 = vmatprep.subr.mxu0 0.0
        %480 = vmatpush1.msra.mxu0 0.0
        %481 = vmatprep.subr.mxu0 0.0
        %482 = vmatpush1.msra.mxu0 0.0
        %483 = vmatprep.subr.mxu0 0.0
        %484 = vmatpush1.msra.mxu0 0.0
        %485 = vmatprep.subr.mxu0 0.0
        %486 = vmatpush1.msra.mxu0 %v450
        %487 = vmatprep.subr.mxu0 0.0
        %488 = vmatpush2.msra.mxu0 0.0
        %489 = vmatprep.subr.mxu0 0.0
        %490 = vmatpush2.msra.mxu0 0.0
        %491 = vmatprep.subr.mxu0 0.0
        %492 = vmatpush2.msra.mxu0 0.0
        %493 = vmatprep.subr.mxu0 0.0
        %494 = vmatpush2.msra.mxu0 0.0
        %495 = vmatprep.subr.mxu0 0.0
        %496 = vmatpush2.msra.mxu0 0.0
        %497 = vmatprep.subr.mxu0 0.0
        %498 = vmatpush2.msra.mxu0 0.0
        %499 = vmatprep.subr.mxu0 0.0
        %500 = vmatpush2.msra.mxu0 0.0
        %501 = vmatprep.subr.mxu0 0.0
        %502 = vmatpush2.msra.mxu0 0.0
        %503 = vmatprep.subr.mxu0 0.0
        %504 = vmatpush2.msra.mxu0 0.0
        %505 = vmatprep.subr.mxu0 0.0
        %506 = vmatpush2.msra.mxu0 0.0
        %507 = vmatprep.subr.mxu0 0.0
        %508 = vmatpush2.msra.mxu0 0.0
        %509 = vmatprep.subr.mxu0 0.0
        %510 = vmatpush2.msra.mxu0 0.0
        %511 = vmatprep.subr.mxu0 0.0
        %512 = vmatpush2.msra.mxu0 0.0
        %513 = vmatprep.subr.mxu0 0.0
        %514 = vmatpush2.msra.mxu0 0.0
        %515 = vmatprep.subr.mxu0 0.0
        %516 = vmatpush2.msra.mxu0 0.0
        %517 = vmatprep.subr.mxu0 0.0
        %518 = vmatpush2.msra.mxu0 0.0
        %519 = vmatprep.mubr.f32.mxu0 0.0
        %520 = vmatmul.mubr.f32.gmra.mxu0 %v453
        %v521 = vpop.f32.mrf.mxu0
        %v522 = vadd.f32 0.0, %v521
        %v523 = vpop.f32.mrf.mxu0
        %524 = vdwg.mxu0
        %525 = vst.msk [vmem:[%s278] sm:$0xff] %vm374, %v522
        %s526 = scalar_lea.vmem [#allocation4], 8
        %v527 = vld [vmem:[%s526] sm:$0xff]
        %528 = vrot.lane.b32.xlu0 %v447, 120
        %v529 = vpop.permute.xlu0 %528
        %v530 = vsel %vm451, %v529, 0
        %532 = vmatprep.subr.mxu0 0.0
        %533 = vmatpush1.msra.mxu0 0.0
        %534 = vmatprep.subr.mxu0 0.0
        %535 = vmatpush1.msra.mxu0 0.0
        %536 = vmatprep.subr.mxu0 0.0
        %537 = vmatpush1.msra.mxu0 0.0
        %538 = vmatprep.subr.mxu0 0.0
        %539 = vmatpush1.msra.mxu0 0.0
        %540 = vmatprep.subr.mxu0 0.0
        %541 = vmatpush1.msra.mxu0 0.0
        %542 = vmatprep.subr.mxu0 0.0
        %543 = vmatpush1.msra.mxu0 0.0
        %544 = vmatprep.subr.mxu0 0.0
        %545 = vmatpush1.msra.mxu0 0.0
        %546 = vmatprep.subr.mxu0 0.0
        %547 = vmatpush1.msra.mxu0 0.0
        %548 = vmatprep.subr.mxu0 0.0
        %549 = vmatpush1.msra.mxu0 0.0
        %550 = vmatprep.subr.mxu0 0.0
        %551 = vmatpush1.msra.mxu0 0.0
        %552 = vmatprep.subr.mxu0 0.0
        %553 = vmatpush1.msra.mxu0 0.0
        %554 = vmatprep.subr.mxu0 0.0
        %555 = vmatpush1.msra.mxu0 0.0
        %556 = vmatprep.subr.mxu0 0.0
        %557 = vmatpush1.msra.mxu0 0.0
        %558 = vmatprep.subr.mxu0 0.0
        %559 = vmatpush1.msra.mxu0 0.0
        %560 = vmatprep.subr.mxu0 0.0
        %561 = vmatpush1.msra.mxu0 0.0
        %562 = vmatprep.subr.mxu0 0.0
        %563 = vmatpush1.msra.mxu0 %v527
        %564 = vmatprep.subr.mxu0 0.0
        %565 = vmatpush2.msra.mxu0 0.0
        %566 = vmatprep.subr.mxu0 0.0
        %567 = vmatpush2.msra.mxu0 0.0
        %568 = vmatprep.subr.mxu0 0.0
        %569 = vmatpush2.msra.mxu0 0.0
        %570 = vmatprep.subr.mxu0 0.0
        %571 = vmatpush2.msra.mxu0 0.0
        %572 = vmatprep.subr.mxu0 0.0
        %573 = vmatpush2.msra.mxu0 0.0
        %574 = vmatprep.subr.mxu0 0.0
        %575 = vmatpush2.msra.mxu0 0.0
        %576 = vmatprep.subr.mxu0 0.0
        %577 = vmatpush2.msra.mxu0 0.0
        %578 = vmatprep.subr.mxu0 0.0
        %579 = vmatpush2.msra.mxu0 0.0
        %580 = vmatprep.subr.mxu0 0.0
        %581 = vmatpush2.msra.mxu0 0.0
        %582 = vmatprep.subr.mxu0 0.0
        %583 = vmatpush2.msra.mxu0 0.0
        %584 = vmatprep.subr.mxu0 0.0
        %585 = vmatpush2.msra.mxu0 0.0
        %586 = vmatprep.subr.mxu0 0.0
        %587 = vmatpush2.msra.mxu0 0.0
        %588 = vmatprep.subr.mxu0 0.0
        %589 = vmatpush2.msra.mxu0 0.0
        %590 = vmatprep.subr.mxu0 0.0
        %591 = vmatpush2.msra.mxu0 0.0
        %592 = vmatprep.subr.mxu0 0.0
        %593 = vmatpush2.msra.mxu0 0.0
        %594 = vmatprep.subr.mxu0 0.0
        %595 = vmatpush2.msra.mxu0 0.0
        %596 = vmatprep.mubr.f32.mxu0 0.0
        %597 = vmatmul.mubr.f32.gmra.mxu0 %v530
        %v598 = vpop.f32.mrf.mxu0
        %v599 = vadd.f32 0.0, %v598
        %v600 = vpop.f32.mrf.mxu0
        %601 = vdwg.mxu0
        %s602 = scalar_lea.vmem %s278, 8 [#allocation6]
        %603 = vst.msk [vmem:[%s602] sm:$0xff] %vm374, %v599
        %s604 = scalar_lea.vmem [#allocation4], 16
        %v605 = vld [vmem:[%s604] sm:$0xff]
        %606 = vrot.lane.b32.xlu0 %v447, 112
        %v607 = vpop.permute.xlu0 %606
        %v608 = vsel %vm451, %v607, 0
        %610 = vmatprep.subr.mxu0 0.0
        %611 = vmatpush1.msra.mxu0 0.0
        %612 = vmatprep.subr.mxu0 0.0
        %613 = vmatpush1.msra.mxu0 0.0
        %614 = vmatprep.subr.mxu0 0.0
        %615 = vmatpush1.msra.mxu0 0.0
        %616 = vmatprep.subr.mxu0 0.0
        %617 = vmatpush1.msra.mxu0 0.0
        %618 = vmatprep.subr.mxu0 0.0
        %619 = vmatpush1.msra.mxu0 0.0
        %620 = vmatprep.subr.mxu0 0.0
        %621 = vmatpush1.msra.mxu0 0.0
        %622 = vmatprep.subr.mxu0 0.0
        %623 = vmatpush1.msra.mxu0 0.0
        %624 = vmatprep.subr.mxu0 0.0
        %625 = vmatpush1.msra.mxu0 0.0
        %626 = vmatprep.subr.mxu0 0.0
        %627 = vmatpush1.msra.mxu0 0.0
        %628 = vmatprep.subr.mxu0 0.0
        %629 = vmatpush1.msra.mxu0 0.0
        %630 = vmatprep.subr.mxu0 0.0
        %631 = vmatpush1.msra.mxu0 0.0
        %632 = vmatprep.subr.mxu0 0.0
        %633 = vmatpush1.msra.mxu0 0.0
        %634 = vmatprep.subr.mxu0 0.0
        %635 = vmatpush1.msra.mxu0 0.0
        %636 = vmatprep.subr.mxu0 0.0
        %637 = vmatpush1.msra.mxu0 0.0
        %638 = vmatprep.subr.mxu0 0.0
        %639 = vmatpush1.msra.mxu0 0.0
        %640 = vmatprep.subr.mxu0 0.0
        %641 = vmatpush1.msra.mxu0 %v605
        %642 = vmatprep.subr.mxu0 0.0
        %643 = vmatpush2.msra.mxu0 0.0
        %644 = vmatprep.subr.mxu0 0.0
        %645 = vmatpush2.msra.mxu0 0.0
        %646 = vmatprep.subr.mxu0 0.0
        %647 = vmatpush2.msra.mxu0 0.0
        %648 = vmatprep.subr.mxu0 0.0
        %649 = vmatpush2.msra.mxu0 0.0
        %650 = vmatprep.subr.mxu0 0.0
        %651 = vmatpush2.msra.mxu0 0.0
        %652 = vmatprep.subr.mxu0 0.0
        %653 = vmatpush2.msra.mxu0 0.0
        %654 = vmatprep.subr.mxu0 0.0
        %655 = vmatpush2.msra.mxu0 0.0
        %656 = vmatprep.subr.mxu0 0.0
        %657 = vmatpush2.msra.mxu0 0.0
        %658 = vmatprep.subr.mxu0 0.0
        %659 = vmatpush2.msra.mxu0 0.0
        %660 = vmatprep.subr.mxu0 0.0
        %661 = vmatpush2.msra.mxu0 0.0
        %662 = vmatprep.subr.mxu0 0.0
        %663 = vmatpush2.msra.mxu0 0.0
        %664 = vmatprep.subr.mxu0 0.0
        %665 = vmatpush2.msra.mxu0 0.0
        %666 = vmatprep.subr.mxu0 0.0
        %667 = vmatpush2.msra.mxu0 0.0
        %668 = vmatprep.subr.mxu0 0.0
        %669 = vmatpush2.msra.mxu0 0.0
        %670 = vmatprep.subr.mxu0 0.0
        %671 = vmatpush2.msra.mxu0 0.0
        %672 = vmatprep.subr.mxu0 0.0
        %673 = vmatpush2.msra.mxu0 0.0
        %674 = vmatprep.mubr.f32.mxu0 0.0
        %675 = vmatmul.mubr.f32.gmra.mxu0 %v608
        %v676 = vpop.f32.mrf.mxu0
        %v677 = vadd.f32 0.0, %v676
        %v678 = vpop.f32.mrf.mxu0
        %679 = vdwg.mxu0
        %s680 = scalar_lea.vmem %s278, 16 [#allocation6]
        %681 = vst.msk [vmem:[%s680] sm:$0xff] %vm374, %v677
        %s682 = scalar_lea.vmem [#allocation4], 24
        %v683 = vld [vmem:[%s682] sm:$0xff]
        %684 = vrot.lane.b32.xlu0 %v447, 104
        %v685 = vpop.permute.xlu0 %684
        %v686 = vsel %vm451, %v685, 0
        %688 = vmatprep.subr.mxu0 0.0
        %689 = vmatpush1.msra.mxu0 0.0
        %690 = vmatprep.subr.mxu0 0.0
        %691 = vmatpush1.msra.mxu0 0.0
        %692 = vmatprep.subr.mxu0 0.0
        %693 = vmatpush1.msra.mxu0 0.0
        %694 = vmatprep.subr.mxu0 0.0
        %695 = vmatpush1.msra.mxu0 0.0
        %696 = vmatprep.subr.mxu0 0.0
        %697 = vmatpush1.msra.mxu0 0.0
        %698 = vmatprep.subr.mxu0 0.0
        %699 = vmatpush1.msra.mxu0 0.0
        %700 = vmatprep.subr.mxu0 0.0
        %701 = vmatpush1.msra.mxu0 0.0
        %702 = vmatprep.subr.mxu0 0.0
        %703 = vmatpush1.msra.mxu0 0.0
        %704 = vmatprep.subr.mxu0 0.0
        %705 = vmatpush1.msra.mxu0 0.0
        %706 = vmatprep.subr.mxu0 0.0
        %707 = vmatpush1.msra.mxu0 0.0
        %708 = vmatprep.subr.mxu0 0.0
        %709 = vmatpush1.msra.mxu0 0.0
        %710 = vmatprep.subr.mxu0 0.0
        %711 = vmatpush1.msra.mxu0 0.0
        %712 = vmatprep.subr.mxu0 0.0
        %713 = vmatpush1.msra.mxu0 0.0
        %714 = vmatprep.subr.mxu0 0.0
        %715 = vmatpush1.msra.mxu0 0.0
        %716 = vmatprep.subr.mxu0 0.0
        %717 = vmatpush1.msra.mxu0 0.0
        %718 = vmatprep.subr.mxu0 0.0
        %719 = vmatpush1.msra.mxu0 %v683
        %720 = vmatprep.subr.mxu0 0.0
        %721 = vmatpush2.msra.mxu0 0.0
        %722 = vmatprep.subr.mxu0 0.0
        %723 = vmatpush2.msra.mxu0 0.0
        %724 = vmatprep.subr.mxu0 0.0
        %725 = vmatpush2.msra.mxu0 0.0
        %726 = vmatprep.subr.mxu0 0.0
        %727 = vmatpush2.msra.mxu0 0.0
        %728 = vmatprep.subr.mxu0 0.0
        %729 = vmatpush2.msra.mxu0 0.0
        %730 = vmatprep.subr.mxu0 0.0
        %731 = vmatpush2.msra.mxu0 0.0
        %732 = vmatprep.subr.mxu0 0.0
        %733 = vmatpush2.msra.mxu0 0.0
        %734 = vmatprep.subr.mxu0 0.0
        %735 = vmatpush2.msra.mxu0 0.0
        %736 = vmatprep.subr.mxu0 0.0
        %737 = vmatpush2.msra.mxu0 0.0
        %738 = vmatprep.subr.mxu0 0.0
        %739 = vmatpush2.msra.mxu0 0.0
        %740 = vmatprep.subr.mxu0 0.0
        %741 = vmatpush2.msra.mxu0 0.0
        %742 = vmatprep.subr.mxu0 0.0
        %743 = vmatpush2.msra.mxu0 0.0
        %744 = vmatprep.subr.mxu0 0.0
        %745 = vmatpush2.msra.mxu0 0.0
        %746 = vmatprep.subr.mxu0 0.0
        %747 = vmatpush2.msra.mxu0 0.0
        %748 = vmatprep.subr.mxu0 0.0
        %749 = vmatpush2.msra.mxu0 0.0
        %750 = vmatprep.subr.mxu0 0.0
        %751 = vmatpush2.msra.mxu0 0.0
        %752 = vmatprep.mubr.f32.mxu0 0.0
        %753 = vmatmul.mubr.f32.gmra.mxu0 %v686
        %v754 = vpop.f32.mrf.mxu0
        %v755 = vadd.f32 0.0, %v754
        %v756 = vpop.f32.mrf.mxu0
        %757 = vdwg.mxu0
        %s758 = scalar_lea.vmem %s278, 24 [#allocation6]
        %759 = vst.msk [vmem:[%s758] sm:$0xff] %vm374, %v755
        %p760 = scmp.lt.s32.totalorder %s23, 1
        %s761 = scalar_select %p760, %s23, 1
        %p762 = scmp.lt.s32.totalorder %s24, 2
        %s763 = scalar_select %p762, %s24, 2
        %s764 = smul.addr %s761, 3
        %s765 = sadd.s32 %s763, %s764
        %s766 = smul.addr %s765, 8
        %s767 = scalar_lea.vmem %s4, %s766
        %s768 = sand.u32 %s160, 1
        %s769 = sand.u32 %s160, 1
        %s770 = smul.addr %s769, 32
        %s771 = scalar_lea.vmem [#allocation6], %s770
        // Predicated region
        $region45: #{tpu_custom_call.1} parent=35 // pred_check
          %p772 = pneg %p142
        $region46: #{tpu_custom_call.1} parent=35 // pred_check_branch
          %774 = sbr.rel (%p772) target = $region48
        $region47: #{tpu_custom_call.1} parent=35 // pred_region
          _
        $region48: #{tpu_custom_call.1} parent=35 // pred_fallthru
          _
        // Predicated region
        $region49: #{tpu_custom_call.1} parent=35 // pred_check
          %p775 = pneg %p170
        $region50: #{tpu_custom_call.1} parent=35 // pred_check_branch
          %777 = sbr.rel (%p775) target = $region52
        $region51: #{tpu_custom_call.1} parent=35 // pred_region
          %s778 = smul.addr %s23, 12
          %s779 = sadd.s32 %s24, %s778
          %s780 = smul.addr %s779, 8
          %s781 = scalar_lea.vmem %s5, %s780
          // Predicated region
          $region53: #{tpu_custom_call.1} parent=51 // pred_check
            _
          $region54: #{tpu_custom_call.1} parent=51 // pred_check_branch
            %783 = sbr.rel (0) target = $region56
          $region55: #{tpu_custom_call.1} parent=51 // pred_region
            // Predicated region
            $region57: #{tpu_custom_call.1} parent=55 // pred_check
              _
            $region58: #{tpu_custom_call.1} parent=55 // pred_check_branch
              %785 = sbr.rel (0) target = $region60
            $region59: #{tpu_custom_call.1} parent=55 // pred_region
              // Predicated region
              $region72: #{tpu_custom_call.1} parent=59 // pred_check
                _
              $region73: #{tpu_custom_call.1} parent=59 // pred_check_branch
                %807 = sbr.rel (0) target = $region75
              $region74: #{tpu_custom_call.1} parent=59 // pred_region
                loop: start=0, step=1, limit=1
                $region76: #{tpu_custom_call.1} parent=74 // loop_pre_header
                  _
                $region77: #{tpu_custom_call.1} parent=74 // loop_header
                  %s809 = sphi 0, %s813
                  %p810 = scmp.ge.s32.totalorder %s809, 1
                  %s814 = sphi %s771, %s771
                  %s815 = sphi %s781, %s781
                $region78: #{tpu_custom_call.1} parent=74 // loop_header_branch
                  %812 = sbr.rel (%p810) target = $region82
                $region79: #{tpu_custom_call.1} parent=74 // loop_body
                  %v816 = vld [vmem:[%s814] sm:$0xff]
                  %817 = vst [vmem:[%s815] sm:$0xff] %v816
                  %v818 = vld [vmem:[%s814 + $0x8] sm:$0xff]
                  %819 = vst [vmem:[%s815 + $0x18] sm:$0xff] %v818
                  %v820 = vld [vmem:[%s814 + $0x10] sm:$0xff]
                  %821 = vst [vmem:[%s815 + $0x30] sm:$0xff] %v820
                  %v822 = vld [vmem:[%s814 + $0x18] sm:$0xff]
                  %823 = vst [vmem:[%s815 + $0x48] sm:$0xff] %v822
                $region80: #{tpu_custom_call.1} parent=74 // loop_footer
                  %s813 = sadd.s32 1, %s809
                $region81: #{tpu_custom_call.1} parent=74 // loop_footer_branch
                  %808 = sbr.rel target = $region77
                $region82: #{tpu_custom_call.1} parent=74 // loop_exit
                  _
              $region75: #{tpu_custom_call.1} parent=59 // pred_fallthru
                _
              // Predicated region
              $region83: #{tpu_custom_call.1} parent=59 // pred_check
                _
              $region84: #{tpu_custom_call.1} parent=59 // pred_check_branch
                %825 = sbr.rel target = $region86
              $region85: #{tpu_custom_call.1} parent=59 // pred_region
                _
              $region86: #{tpu_custom_call.1} parent=59 // pred_fallthru
                _
            $region60: #{tpu_custom_call.1} parent=55 // pred_fallthru
              _
            // Predicated region
            $region61: #{tpu_custom_call.1} parent=55 // pred_check
              _
            $region62: #{tpu_custom_call.1} parent=55 // pred_check_branch
              %787 = sbr.rel target = $region64
            $region63: #{tpu_custom_call.1} parent=55 // pred_region
              %s789 = ssub.s32 256, 1
              loop: start=0, step=1, limit=1
              $region65: #{tpu_custom_call.1} parent=63 // loop_pre_header
                _
              $region66: #{tpu_custom_call.1} parent=63 // loop_header
                %s791 = sphi 0, %s795
                %p792 = scmp.ge.s32.totalorder %s791, 1
                %s796 = sphi %s771, %s771
                %s797 = sphi %s781, %s781
              $region67: #{tpu_custom_call.1} parent=63 // loop_header_branch
                %794 = sbr.rel (%p792) target = $region71
              $region68: #{tpu_custom_call.1} parent=63 // loop_body
                %v798 = vld [vmem:[%s796] sm:%s789]
                %799 = vst [vmem:[%s797] sm:%s789] %v798
                %v800 = vld [vmem:[%s796 + $0x8] sm:%s789]
                %801 = vst [vmem:[%s797 + $0x18] sm:%s789] %v800
                %v802 = vld [vmem:[%s796 + $0x10] sm:%s789]
                %803 = vst [vmem:[%s797 + $0x30] sm:%s789] %v802
                %v804 = vld [vmem:[%s796 + $0x18] sm:%s789]
                %805 = vst [vmem:[%s797 + $0x48] sm:%s789] %v804
              $region69: #{tpu_custom_call.1} parent=63 // loop_footer
                %s795 = sadd.s32 1, %s791
              $region70: #{tpu_custom_call.1} parent=63 // loop_footer_branch
                %790 = sbr.rel target = $region66
              $region71: #{tpu_custom_call.1} parent=63 // loop_exit
                _
            $region64: #{tpu_custom_call.1} parent=55 // pred_fallthru
              _
          $region56: #{tpu_custom_call.1} parent=51 // pred_fallthru
            _
          %826 = vnop
        $region52: #{tpu_custom_call.1} parent=35 // pred_fallthru
          _
      $region36: #{tpu_custom_call.1} parent=5 // pred_fallthru
        _
      %p827 = scmp.le.s32.totalorder 2, %s14
      // Predicated region
      $region87: #{tpu_custom_call.1} parent=5 // pred_check
        %p828 = pneg %p827
      $region88: #{tpu_custom_call.1} parent=5 // pred_check_branch
        %830 = sbr.rel (%p828) target = $region90
      $region89: #{tpu_custom_call.1} parent=5 // pred_region
        %s831 = ssub.s32 %s14, 2
        // Predicated region
        $region91: #{tpu_custom_call.1} parent=89 // pred_check
          %p832 = pneg %p148
        $region92: #{tpu_custom_call.1} parent=89 // pred_check_branch
          %834 = sbr.rel (%p832) target = $region94
        $region93: #{tpu_custom_call.1} parent=89 // pred_region
          %p835 = scmp.lt.s32.totalorder %s25, 1
          %s836 = scalar_select %p835, %s25, 1
          %p837 = scmp.lt.s32.totalorder %s26, 2
          %s838 = scalar_select %p837, %s26, 2
          %s839 = smul.addr %s836, 3
          %s840 = sadd.s32 %s838, %s839
          %s841 = smul.addr %s840, 8
          %s842 = scalar_lea.vmem %s4, %s841
        $region94: #{tpu_custom_call.1} parent=89 // pred_fallthru
          _
        // Predicated region
        $region95: #{tpu_custom_call.1} parent=89 // pred_check
          %p843 = pneg %p176
        $region96: #{tpu_custom_call.1} parent=89 // pred_check_branch
          %845 = sbr.rel (%p843) target = $region98
        $region97: #{tpu_custom_call.1} parent=89 // pred_region
          %s846 = sand.u32 %s161, 1
          %s847 = sand.u32 %s161, 1
          %s848 = smul.addr %s847, 32
          %s849 = scalar_lea.vmem [#allocation6], %s848
        $region98: #{tpu_custom_call.1} parent=89 // pred_fallthru
          _
      $region90: #{tpu_custom_call.1} parent=5 // pred_fallthru
        _
    $region6: #{tpu_custom_call.1} parent=1 // loop_footer
      %s18 = sadd.s32 1, %s14
    $region7: #{tpu_custom_call.1} parent=1 // loop_footer_branch
      %13 = sbr.rel target = $region3
    $region8: #{tpu_custom_call.1} parent=1 // loop_exit
      _
    %850 = vsyncpa [#allocation3], 1
    %s851 = scalar_lea.sflag [#allocation3], 1
    %852 = vsyncpa %s851, 1
    %853 = vsyncpa [#allocation5], 1

</llo_original>
